<compile_context>
chip_gen: v7x
topology: tpu7x:2x2x1
jax: 0.10.0
libtpu: 0.0.40
codegen_flags: <defaults>
</compile_context>

<pallas_src>
import jax
import jax.numpy as jnp
from jax import lax
from jax.experimental import pallas as pl
from jax.experimental.pallas import tpu as pltpu

# --- small synthetic CLIP-text config (real CLIP-B/32: S=77, H=512, NH=8, L=12) ---
B, S = 2, 8                 # batch, sequence length
H = 128                     # hidden size (lane-dense: multiple of 128)
NH = 4                      # attention heads
HD = H // NH                # head dim (32)
MLP = 4 * H                 # intermediate size (512)
LAYERS = 2                  # transformer layers
VOCAB = 64                  # vocab size
EPS = 1e-5
DTYPE = jnp.float32
T = B * S
SCALE = HD ** -0.5
NEG_INF = -1e9


# ----------------------------- math helpers -----------------------------

def _layer_norm(x, w, b):
    # one-pass stats: mean and mean(x^2) are independent reductions
    mu = jnp.mean(x, axis=-1, keepdims=True)
    ms = jnp.mean(x * x, axis=-1, keepdims=True)
    var = ms - mu * mu
    return (x - mu) * lax.rsqrt(var + EPS) * w + b


def _quick_gelu(x):
    # CLIP uses quick_gelu: x * sigmoid(1.702 * x)
    return x * jax.nn.sigmoid(1.702 * x)


# ----------------------------- fused Pallas kernel ------------------------------

def clip_encoder_kernel(x_ref,
                        ln1w_ref, ln1b_ref,
                        wqkv_ref, bqkv_ref,
                        wo_ref, bo_ref,
                        ln2w_ref, ln2b_ref,
                        fc1w_ref, fc1b_ref,
                        fc2w_ref, fc2b_ref,
                        lnfw_ref, lnfb_ref,
                        o_ref,
                        ctx_scr):
    """grid = (batch, layer). Activations carried in o_ref across the layer axis."""
    layer = pl.program_id(1)

    @pl.when(layer == 0)
    def _():
        o_ref[...] = x_ref[...]

    x = o_ref[...].astype(jnp.float32)                 # (S, H) one sequence

    # causal mask built in-kernel: two iota compares, no O(S^2) HBM buffer
    row = lax.broadcasted_iota(jnp.int32, (S, S), 0)
    col = lax.broadcasted_iota(jnp.int32, (S, S), 1)
    bias = jnp.where(col <= row, 0.0, NEG_INF).astype(jnp.float32)

    # --- self-attention block (pre-LN) ---
    h = _layer_norm(x, ln1w_ref[0], ln1b_ref[0]).astype(jnp.bfloat16)
    qkv = jnp.dot(h, wqkv_ref[0], preferred_element_type=jnp.float32) + bqkv_ref[0]
    q = qkv[:, 0:H] * SCALE                            # 128-lane-aligned slices
    k = qkv[:, H:2 * H]
    v = qkv[:, 2 * H:3 * H]

    for n in range(NH):                                # unrolled at trace time
        sl = slice(n * HD, (n + 1) * HD)
        qh, kh, vh = q[:, sl], k[:, sl], v[:, sl]      # (S, HD)
        # contract last dims directly -> no explicit kh.T (no XLU transpose)
        s = lax.dot_general(qh, kh, (((1,), (1,)), ((), ())),
                            preferred_element_type=jnp.float32) + bias
        s = s - jnp.max(s, axis=-1, keepdims=True)
        e = jnp.exp(s)
        p = e / jnp.sum(e, axis=-1, keepdims=True)     # exact divide
        # write head ctx into its 32-lane column slice of the (S, H) scratch
        ctx_scr[:, sl] = jnp.dot(p, vh, preferred_element_type=jnp.float32)

    # single K=128 output projection (bf16 MXU, f32 accumulate)
    attn = jnp.dot(ctx_scr[...].astype(jnp.bfloat16), wo_ref[0],
                   preferred_element_type=jnp.float32) + bo_ref[0]
    x = x + attn

    # --- MLP block (pre-LN) ---
    h2 = _layer_norm(x, ln2w_ref[0], ln2b_ref[0]).astype(jnp.bfloat16)
    f1 = _quick_gelu(jnp.dot(h2, fc1w_ref[0], preferred_element_type=jnp.float32)
                     + fc1b_ref[0])
    x = x + jnp.dot(f1.astype(jnp.bfloat16), fc2w_ref[0],
                    preferred_element_type=jnp.float32) + fc2b_ref[0]

    o_ref[...] = x.astype(o_ref.dtype)

    @pl.when(layer == pl.num_programs(1) - 1)
    def _():
        o_ref[...] = _layer_norm(x, lnfw_ref[...], lnfb_ref[...]).astype(o_ref.dtype)


# ------------------------------ pallas_call glue ---------------------------

_STACKED_ORDER = ('ln1_w', 'ln1_b', 'wqkv', 'bqkv', 'wo', 'bo',
                  'ln2_w', 'ln2_b', 'fc1_w', 'fc1_b', 'fc2_w', 'fc2_b')


def _seq_spec():
    # one sequence (S rows of the flattened (B*S, H) slab) per batch grid index
    return pl.BlockSpec((S, H), lambda b, l: (b, 0))


def _layer_spec(shape):
    # stacked per-layer weight: leading axis indexed by the layer grid axis
    nz = len(shape) - 1
    return pl.BlockSpec((1,) + tuple(shape[1:]),
                        lambda b, l, _n=nz: (l,) + (0,) * _n)


def _const_spec(shape):
    nz = len(shape)
    return pl.BlockSpec(tuple(shape), lambda b, l, _n=nz: (0,) * _n)


@jax.jit
def text_encoder_forward(input_ids, params):
    # TODO(synk): HF tokenizer (string -> input_ids) has no Pallas equivalent;
    # deterministic token ids stand in for the tokenizer output.
    # TODO(synk): at real CLIP sizes fold this gather into the kernel via
    # PrefetchScalarGridSpec; at toy sizes it stays in plain JAX.
    x = jnp.take(params['tok_emb'], input_ids, axis=0) + params['pos_emb'][None, :, :]
    x = x.reshape(T, H).astype(DTYPE)

    stacked_ws = [params[k] for k in _STACKED_ORDER]

    in_specs = ([_seq_spec()]
                + [_layer_spec(w.shape) for w in stacked_ws]
                + [_const_spec(params['ln_f_w'].shape),
                   _const_spec(params['ln_f_b'].shape)])

    out = pl.pallas_call(
        clip_encoder_kernel,
        out_shape=jax.ShapeDtypeStruct((T, H), DTYPE),
        grid=(B, LAYERS),
        in_specs=in_specs,
        out_specs=_seq_spec(),
        scratch_shapes=[pltpu.VMEM((S, H), jnp.float32)],
        compiler_params=pltpu.CompilerParams(
            dimension_semantics=("parallel", "arbitrary")),
    )(x, *stacked_ws, params['ln_f_w'], params['ln_f_b'])
    return out.reshape(B, S, H)


# ------------------------- reference (pure JAX) -----------------------------
# Same mixed-precision policy as the kernel (bf16 weights + bf16 activations
# into the matmuls, f32 accumulation, f32 LN/softmax/residual).

def _ref_forward(input_ids, params):
    f32 = jnp.float32
    x = (jnp.take(params['tok_emb'], input_ids, axis=0)
         + params['pos_emb'][None, :, :]).astype(f32)
    qi = jnp.arange(S)[:, None]
    ki = jnp.arange(S)[None, :]
    bias = jnp.where(ki <= qi, 0.0, NEG_INF).astype(f32)
    for l in range(LAYERS):
        h = _layer_norm(x, params['ln1_w'][l], params['ln1_b'][l]).astype(jnp.bfloat16)
        qkv = jnp.dot(h, params['wqkv'][l],
                      preferred_element_type=f32) + params['bqkv'][l]
        q = (qkv[..., :H] * SCALE).reshape(B, S, NH, HD)
        k = qkv[..., H:2 * H].reshape(B, S, NH, HD)
        v = qkv[..., 2 * H:].reshape(B, S, NH, HD)
        sc = jnp.einsum('bqhd,bkhd->bhqk', q, k) + bias
        p = jax.nn.softmax(sc, axis=-1)
        ctx = jnp.einsum('bhqk,bkhd->bqhd', p, v).reshape(B, S, H)
        x = x + jnp.dot(ctx.astype(jnp.bfloat16), params['wo'][l],
                        preferred_element_type=f32) + params['bo'][l]
        h2 = _layer_norm(x, params['ln2_w'][l], params['ln2_b'][l]).astype(jnp.bfloat16)
        f1 = _quick_gelu(jnp.dot(h2, params['fc1_w'][l],
                                 preferred_element_type=f32) + params['fc1_b'][l])
        x = x + jnp.dot(f1.astype(jnp.bfloat16), params['fc2_w'][l],
                        preferred_element_type=f32) + params['fc2_b'][l]
    return _layer_norm(x, params['ln_f_w'], params['ln_f_b'])


# ----------------------------- parameter init -------------------------------

def init_params(key):
    ks = jax.random.split(key, 10)

    def w(k, shape, scale=0.02, dtype=jnp.float32):
        return (scale * jax.random.normal(k, shape, jnp.float32)).astype(dtype)

    bf = jnp.bfloat16
    return {
        'tok_emb': w(ks[0], (VOCAB, H)),
        'pos_emb': w(ks[1], (S, H)),
        'ln1_w': jnp.ones((LAYERS, 1, H), DTYPE),
        'ln1_b': jnp.zeros((LAYERS, 1, H), DTYPE),
        'wqkv': w(ks[2], (LAYERS, H, 3 * H), dtype=bf),     # bf16 weight streaming
        'bqkv': w(ks[3], (LAYERS, 1, 3 * H), 0.01),
        'wo': w(ks[4], (LAYERS, H, H), dtype=bf),
        'bo': w(ks[5], (LAYERS, 1, H), 0.01),
        'ln2_w': jnp.ones((LAYERS, 1, H), DTYPE),
        'ln2_b': jnp.zeros((LAYERS, 1, H), DTYPE),
        'fc1_w': w(ks[6], (LAYERS, H, MLP), dtype=bf),
        'fc1_b': w(ks[7], (LAYERS, 1, MLP), 0.01),
        'fc2_w': w(ks[8], (LAYERS, MLP, H), dtype=bf),
        'fc2_b': w(ks[9], (LAYERS, 1, H), 0.01),
        'ln_f_w': jnp.ones((1, H), DTYPE),
        'ln_f_b': jnp.zeros((1, H), DTYPE),
    }


# ---------------------------------- main -------------------------------------

if __name__ == "__main__":
    params = init_params(jax.random.PRNGKey(0))
    input_ids = jax.random.randint(jax.random.PRNGKey(0), (B, S), 0, VOCAB,
                                   dtype=jnp.int32)

    out = text_encoder_forward(input_ids, params)
    jax.block_until_ready(out)

    ref = _ref_forward(input_ids, params)
    assert out.shape == (B, S, H), out.shape
    err = float(jnp.max(jnp.abs(out - ref)))
    assert jnp.allclose(out, ref, atol=5e-3, rtol=5e-3), err
    print("KERNEL_OK")
</pallas_src>

<mosaic_0001>
module attributes {stable_mosaic.version = 11 : i64} {
  func.func @clip_encoder_kernel(%arg0: i32, %arg1: i32, %arg2: memref<8x128xf32, #tpu.memory_space<vmem>>, %arg3: memref<1x1x128xf32, #tpu.memory_space<vmem>>, %arg4: memref<1x1x128xf32, #tpu.memory_space<vmem>>, %arg5: memref<1x128x384xbf16, #tpu.memory_space<vmem>>, %arg6: memref<1x1x384xf32, #tpu.memory_space<vmem>>, %arg7: memref<1x128x128xbf16, #tpu.memory_space<vmem>>, %arg8: memref<1x1x128xf32, #tpu.memory_space<vmem>>, %arg9: memref<1x1x128xf32, #tpu.memory_space<vmem>>, %arg10: memref<1x1x128xf32, #tpu.memory_space<vmem>>, %arg11: memref<1x128x512xbf16, #tpu.memory_space<vmem>>, %arg12: memref<1x1x512xf32, #tpu.memory_space<vmem>>, %arg13: memref<1x512x128xbf16, #tpu.memory_space<vmem>>, %arg14: memref<1x1x128xf32, #tpu.memory_space<vmem>>, %arg15: memref<1x128xf32, #tpu.memory_space<vmem>>, %arg16: memref<1x128xf32, #tpu.memory_space<vmem>>, %arg17: memref<8x128xf32, #tpu.memory_space<vmem>>, %arg18: memref<8x128xf32, #tpu.memory_space<vmem>>) attributes {dimension_semantics = [#tpu.dimension_semantics<parallel>, #tpu.dimension_semantics<arbitrary>], iteration_bounds = array<i64: 2, 2>, scalar_prefetch = 0 : i64, scratch_operands = 1 : i64, tpu.core_type = #tpu.core_type<tc>, window_params = [{transform_indices = @transform_0, window_bounds = array<i64: 8, 128>}, {transform_indices = @transform_1, window_bounds = array<i64: 1, 1, 128>}, {transform_indices = @transform_2, window_bounds = array<i64: 1, 1, 128>}, {transform_indices = @transform_3, window_bounds = array<i64: 1, 128, 384>}, {transform_indices = @transform_4, window_bounds = array<i64: 1, 1, 384>}, {transform_indices = @transform_5, window_bounds = array<i64: 1, 128, 128>}, {transform_indices = @transform_6, window_bounds = array<i64: 1, 1, 128>}, {transform_indices = @transform_7, window_bounds = array<i64: 1, 1, 128>}, {transform_indices = @transform_8, window_bounds = array<i64: 1, 1, 128>}, {transform_indices = @transform_9, window_bounds = array<i64: 1, 128, 512>}, {transform_indices = @transform_10, window_bounds = array<i64: 1, 1, 512>}, {transform_indices = @transform_11, window_bounds = array<i64: 1, 512, 128>}, {transform_indices = @transform_12, window_bounds = array<i64: 1, 1, 128>}, {pipeline_mode = #tpu.pipeline_mode<synchronous>, transform_indices = @transform_13, window_bounds = array<i64: 1, 128>}, {pipeline_mode = #tpu.pipeline_mode<synchronous>, transform_indices = @transform_14, window_bounds = array<i64: 1, 128>}, {transform_indices = @transform_15, window_bounds = array<i64: 8, 128>}]} {
    %c0_i32 = arith.constant 0 : i32
    %0 = arith.cmpi eq, %arg1, %c0_i32 : i32
    %1 = arith.extui %0 : i1 to i32
    %c0_i32_0 = arith.constant 0 : i32
    %2 = arith.cmpi ne, %1, %c0_i32_0 : i32
    scf.if %2 {
      %c0_82 = arith.constant 0 : index
      %c0_83 = arith.constant 0 : index
      %178 = vector.load %arg2[%c0_82, %c0_83] : memref<8x128xf32, #tpu.memory_space<vmem>>, vector<8x128xf32>
      %c0_84 = arith.constant 0 : index
      %c0_85 = arith.constant 0 : index
      %179 = vector.load %arg17[%c0_84, %c0_85] : memref<8x128xf32, #tpu.memory_space<vmem>>, vector<8x128xf32>
      tpu.vector_store %arg17[%c0_84, %c0_85], %178 {strides = array<i32>} : memref<8x128xf32, #tpu.memory_space<vmem>>, vector<8x128xf32>,
    } else {
    }
    %c0 = arith.constant 0 : index
    %c0_1 = arith.constant 0 : index
    %3 = vector.load %arg17[%c0, %c0_1] : memref<8x128xf32, #tpu.memory_space<vmem>>, vector<8x128xf32>
    %4 = tpu.iota {dimensions = array<i32: 0>} : vector<8x8xi32>
    %5 = tpu.iota {dimensions = array<i32: 1>} : vector<8x8xi32>
    %6 = arith.cmpi sle, %5, %4 : vector<8x8xi32>
    %cst = arith.constant 0.000000e+00 : f32
    %cst_2 = arith.constant -1.000000e+09 : f32
    %7 = vector.broadcast %cst : f32 to vector<8x8xf32>
    %8 = vector.broadcast %cst_2 : f32 to vector<8x8xf32>
    %9 = arith.select %6, %7, %8 : vector<8x8xi1>, vector<8x8xf32>
    %c0_3 = arith.constant 0 : index
    %c0_4 = arith.constant 0 : index
    %c0_5 = arith.constant 0 : index
    %10 = vector.load %arg3[%c0_3, %c0_4, %c0_5] : memref<1x1x128xf32, #tpu.memory_space<vmem>>, vector<1x1x128xf32>
    %11 = vector.shape_cast %10 : vector<1x1x128xf32> to vector<1x128xf32>
    %c0_6 = arith.constant 0 : index
    %c0_7 = arith.constant 0 : index
    %c0_8 = arith.constant 0 : index
    %12 = vector.load %arg4[%c0_6, %c0_7, %c0_8] : memref<1x1x128xf32, #tpu.memory_space<vmem>>, vector<1x1x128xf32>
    %13 = vector.shape_cast %12 : vector<1x1x128xf32> to vector<1x128xf32>
    %cst_9 = arith.constant dense<0.000000e+00> : vector<8xf32>
    %14 = vector.multi_reduction <add>, %3, %cst_9 [1] : vector<8x128xf32> to vector<8xf32>
    %15 = vector.shape_cast %14 : vector<8xf32> to vector<8x1xf32>
    %cst_10 = arith.constant 1.280000e+02 : f32
    %16 = vector.broadcast %cst_10 : f32 to vector<8x1xf32>
    %17 = arith.divf %15, %16 : vector<8x1xf32>
    %18 = arith.mulf %3, %3 : vector<8x128xf32>
    %cst_11 = arith.constant dense<0.000000e+00> : vector<8xf32>
    %19 = vector.multi_reduction <add>, %18, %cst_11 [1] : vector<8x128xf32> to vector<8xf32>
    %20 = vector.shape_cast %19 : vector<8xf32> to vector<8x1xf32>
    %cst_12 = arith.constant 1.280000e+02 : f32
    %21 = vector.broadcast %cst_12 : f32 to vector<8x1xf32>
    %22 = arith.divf %20, %21 : vector<8x1xf32>
    %23 = arith.mulf %17, %17 : vector<8x1xf32>
    %24 = arith.subf %22, %23 : vector<8x1xf32>
    %25 = vector.broadcast %17 : vector<8x1xf32> to vector<8x128xf32>
    %26 = arith.subf %3, %25 : vector<8x128xf32>
    %cst_13 = arith.constant 9.99999974E-6 : f32
    %27 = vector.broadcast %cst_13 : f32 to vector<8x1xf32>
    %28 = arith.addf %24, %27 : vector<8x1xf32>
    %29 = math.rsqrt %28 : vector<8x1xf32>
    %30 = vector.broadcast %29 : vector<8x1xf32> to vector<8x128xf32>
    %31 = arith.mulf %26, %30 : vector<8x128xf32>
    %32 = vector.broadcast %11 : vector<1x128xf32> to vector<8x128xf32>
    %33 = arith.mulf %31, %32 : vector<8x128xf32>
    %34 = vector.broadcast %13 : vector<1x128xf32> to vector<8x128xf32>
    %35 = arith.addf %33, %34 : vector<8x128xf32>
    %36 = arith.truncf %35 : vector<8x128xf32> to vector<8x128xbf16>
    %c0_14 = arith.constant 0 : index
    %c0_15 = arith.constant 0 : index
    %c0_16 = arith.constant 0 : index
    %37 = vector.load %arg5[%c0_14, %c0_15, %c0_16] : memref<1x128x384xbf16, #tpu.memory_space<vmem>>, vector<1x128x384xbf16>
    %38 = vector.shape_cast %37 : vector<1x128x384xbf16> to vector<128x384xbf16>
    %cst_17 = arith.constant dense<0.000000e+00> : vector<8x384xf32>
    %39 = tpu.matmul %36, %38, %cst_17 {dimension_numbers = #tpu.dot_dimension_numbers<[1], [0], [0], [1], [0, 0, 1, 1], [], []>} : vector<8x128xbf16>, vector<128x384xbf16>, vector<8x384xf32> -> vector<8x384xf32>
    %c0_18 = arith.constant 0 : index
    %c0_19 = arith.constant 0 : index
    %c0_20 = arith.constant 0 : index
    %40 = vector.load %arg6[%c0_18, %c0_19, %c0_20] : memref<1x1x384xf32, #tpu.memory_space<vmem>>, vector<1x1x384xf32>
    %41 = vector.shape_cast %40 : vector<1x1x384xf32> to vector<1x384xf32>
    %42 = vector.broadcast %41 : vector<1x384xf32> to vector<8x384xf32>
    %43 = arith.addf %39, %42 : vector<8x384xf32>
    %44 = vector.extract_strided_slice %43 {offsets = [0, 0], sizes = [8, 128], strides = [1, 1]} : vector<8x384xf32> to vector<8x128xf32>
    %cst_21 = arith.constant 0.176776692 : f32
    %45 = vector.broadcast %cst_21 : f32 to vector<8x128xf32>
    %46 = arith.mulf %44, %45 : vector<8x128xf32>
    %47 = vector.extract_strided_slice %43 {offsets = [0, 128], sizes = [8, 128], strides = [1, 1]} : vector<8x384xf32> to vector<8x128xf32>
    %48 = vector.extract_strided_slice %43 {offsets = [0, 256], sizes = [8, 128], strides = [1, 1]} : vector<8x384xf32> to vector<8x128xf32>
    %49 = vector.extract_strided_slice %46 {offsets = [0, 0], sizes = [8, 32], strides = [1, 1]} : vector<8x128xf32> to vector<8x32xf32>
    %50 = vector.extract_strided_slice %47 {offsets = [0, 0], sizes = [8, 32], strides = [1, 1]} : vector<8x128xf32> to vector<8x32xf32>
    %51 = vector.extract_strided_slice %48 {offsets = [0, 0], sizes = [8, 32], strides = [1, 1]} : vector<8x128xf32> to vector<8x32xf32>
    %cst_22 = arith.constant dense<0.000000e+00> : vector<8x8xf32>
    %52 = tpu.matmul %49, %50, %cst_22 {dimension_numbers = #tpu.dot_dimension_numbers<[1], [1], [0], [0], [0, 0, 1, 0], [], []>} : vector<8x32xf32>, vector<8x32xf32>, vector<8x8xf32> -> vector<8x8xf32>
    %53 = arith.addf %52, %9 : vector<8x8xf32>
    %cst_23 = arith.constant dense<0xFF800000> : vector<8xf32>
    %54 = vector.multi_reduction <maximumf>, %53, %cst_23 [1] : vector<8x8xf32> to vector<8xf32>
    %55 = vector.shape_cast %54 : vector<8xf32> to vector<8x1xf32>
    %56 = vector.broadcast %55 : vector<8x1xf32> to vector<8x8xf32>
    %57 = arith.subf %53, %56 : vector<8x8xf32>
    %58 = math.exp %57 : vector<8x8xf32>
    %cst_24 = arith.constant dense<0.000000e+00> : vector<8xf32>
    %59 = vector.multi_reduction <add>, %58, %cst_24 [1] : vector<8x8xf32> to vector<8xf32>
    %60 = vector.shape_cast %59 : vector<8xf32> to vector<8x1xf32>
    %61 = vector.broadcast %60 : vector<8x1xf32> to vector<8x8xf32>
    %62 = arith.divf %58, %61 : vector<8x8xf32>
    %cst_25 = arith.constant dense<0.000000e+00> : vector<8x32xf32>
    %63 = tpu.matmul %62, %51, %cst_25 {dimension_numbers = #tpu.dot_dimension_numbers<[1], [0], [0], [1], [0, 0, 1, 1], [], []>} : vector<8x8xf32>, vector<8x32xf32>, vector<8x32xf32> -> vector<8x32xf32>
    %c0_26 = arith.constant 0 : index
    %c0_27 = arith.constant 0 : index
    %64 = vector.load %arg18[%c0_26, %c0_27] : memref<8x128xf32, #tpu.memory_space<vmem>>, vector<8x32xf32>
    tpu.vector_store %arg18[%c0_26, %c0_27], %63 {strides = array<i32>} : memref<8x128xf32, #tpu.memory_space<vmem>>, vector<8x32xf32>,
    %65 = vector.extract_strided_slice %46 {offsets = [0, 32], sizes = [8, 32], strides = [1, 1]} : vector<8x128xf32> to vector<8x32xf32>
    %66 = vector.extract_strided_slice %47 {offsets = [0, 32], sizes = [8, 32], strides = [1, 1]} : vector<8x128xf32> to vector<8x32xf32>
    %67 = vector.extract_strided_slice %48 {offsets = [0, 32], sizes = [8, 32], strides = [1, 1]} : vector<8x128xf32> to vector<8x32xf32>
    %cst_28 = arith.constant dense<0.000000e+00> : vector<8x8xf32>
    %68 = tpu.matmul %65, %66, %cst_28 {dimension_numbers = #tpu.dot_dimension_numbers<[1], [1], [0], [0], [0, 0, 1, 0], [], []>} : vector<8x32xf32>, vector<8x32xf32>, vector<8x8xf32> -> vector<8x8xf32>
    %69 = arith.addf %68, %9 : vector<8x8xf32>
    %cst_29 = arith.constant dense<0xFF800000> : vector<8xf32>
    %70 = vector.multi_reduction <maximumf>, %69, %cst_29 [1] : vector<8x8xf32> to vector<8xf32>
    %71 = vector.shape_cast %70 : vector<8xf32> to vector<8x1xf32>
    %72 = vector.broadcast %71 : vector<8x1xf32> to vector<8x8xf32>
    %73 = arith.subf %69, %72 : vector<8x8xf32>
    %74 = math.exp %73 : vector<8x8xf32>
    %cst_30 = arith.constant dense<0.000000e+00> : vector<8xf32>
    %75 = vector.multi_reduction <add>, %74, %cst_30 [1] : vector<8x8xf32> to vector<8xf32>
    %76 = vector.shape_cast %75 : vector<8xf32> to vector<8x1xf32>
    %77 = vector.broadcast %76 : vector<8x1xf32> to vector<8x8xf32>
    %78 = arith.divf %74, %77 : vector<8x8xf32>
    %cst_31 = arith.constant dense<0.000000e+00> : vector<8x32xf32>
    %79 = tpu.matmul %78, %67, %cst_31 {dimension_numbers = #tpu.dot_dimension_numbers<[1], [0], [0], [1], [0, 0, 1, 1], [], []>} : vector<8x8xf32>, vector<8x32xf32>, vector<8x32xf32> -> vector<8x32xf32>
    %c0_32 = arith.constant 0 : index
    %c32 = arith.constant 32 : index
    %80 = vector.load %arg18[%c0_32, %c32] : memref<8x128xf32, #tpu.memory_space<vmem>>, vector<8x32xf32>
    tpu.vector_store %arg18[%c0_32, %c32], %79 {strides = array<i32>} : memref<8x128xf32, #tpu.memory_space<vmem>>, vector<8x32xf32>,
    %81 = vector.extract_strided_slice %46 {offsets = [0, 64], sizes = [8, 32], strides = [1, 1]} : vector<8x128xf32> to vector<8x32xf32>
    %82 = vector.extract_strided_slice %47 {offsets = [0, 64], sizes = [8, 32], strides = [1, 1]} : vector<8x128xf32> to vector<8x32xf32>
    %83 = vector.extract_strided_slice %48 {offsets = [0, 64], sizes = [8, 32], strides = [1, 1]} : vector<8x128xf32> to vector<8x32xf32>
    %cst_33 = arith.constant dense<0.000000e+00> : vector<8x8xf32>
    %84 = tpu.matmul %81, %82, %cst_33 {dimension_numbers = #tpu.dot_dimension_numbers<[1], [1], [0], [0], [0, 0, 1, 0], [], []>} : vector<8x32xf32>, vector<8x32xf32>, vector<8x8xf32> -> vector<8x8xf32>
    %85 = arith.addf %84, %9 : vector<8x8xf32>
    %cst_34 = arith.constant dense<0xFF800000> : vector<8xf32>
    %86 = vector.multi_reduction <maximumf>, %85, %cst_34 [1] : vector<8x8xf32> to vector<8xf32>
    %87 = vector.shape_cast %86 : vector<8xf32> to vector<8x1xf32>
    %88 = vector.broadcast %87 : vector<8x1xf32> to vector<8x8xf32>
    %89 = arith.subf %85, %88 : vector<8x8xf32>
    %90 = math.exp %89 : vector<8x8xf32>
    %cst_35 = arith.constant dense<0.000000e+00> : vector<8xf32>
    %91 = vector.multi_reduction <add>, %90, %cst_35 [1] : vector<8x8xf32> to vector<8xf32>
    %92 = vector.shape_cast %91 : vector<8xf32> to vector<8x1xf32>
    %93 = vector.broadcast %92 : vector<8x1xf32> to vector<8x8xf32>
    %94 = arith.divf %90, %93 : vector<8x8xf32>
    %cst_36 = arith.constant dense<0.000000e+00> : vector<8x32xf32>
    %95 = tpu.matmul %94, %83, %cst_36 {dimension_numbers = #tpu.dot_dimension_numbers<[1], [0], [0], [1], [0, 0, 1, 1], [], []>} : vector<8x8xf32>, vector<8x32xf32>, vector<8x32xf32> -> vector<8x32xf32>
    %c0_37 = arith.constant 0 : index
    %c64 = arith.constant 64 : index
    %96 = vector.load %arg18[%c0_37, %c64] : memref<8x128xf32, #tpu.memory_space<vmem>>, vector<8x32xf32>
    tpu.vector_store %arg18[%c0_37, %c64], %95 {strides = array<i32>} : memref<8x128xf32, #tpu.memory_space<vmem>>, vector<8x32xf32>,
    %97 = vector.extract_strided_slice %46 {offsets = [0, 96], sizes = [8, 32], strides = [1, 1]} : vector<8x128xf32> to vector<8x32xf32>
    %98 = vector.extract_strided_slice %47 {offsets = [0, 96], sizes = [8, 32], strides = [1, 1]} : vector<8x128xf32> to vector<8x32xf32>
    %99 = vector.extract_strided_slice %48 {offsets = [0, 96], sizes = [8, 32], strides = [1, 1]} : vector<8x128xf32> to vector<8x32xf32>
    %cst_38 = arith.constant dense<0.000000e+00> : vector<8x8xf32>
    %100 = tpu.matmul %97, %98, %cst_38 {dimension_numbers = #tpu.dot_dimension_numbers<[1], [1], [0], [0], [0, 0, 1, 0], [], []>} : vector<8x32xf32>, vector<8x32xf32>, vector<8x8xf32> -> vector<8x8xf32>
    %101 = arith.addf %100, %9 : vector<8x8xf32>
    %cst_39 = arith.constant dense<0xFF800000> : vector<8xf32>
    %102 = vector.multi_reduction <maximumf>, %101, %cst_39 [1] : vector<8x8xf32> to vector<8xf32>
    %103 = vector.shape_cast %102 : vector<8xf32> to vector<8x1xf32>
    %104 = vector.broadcast %103 : vector<8x1xf32> to vector<8x8xf32>
    %105 = arith.subf %101, %104 : vector<8x8xf32>
    %106 = math.exp %105 : vector<8x8xf32>
    %cst_40 = arith.constant dense<0.000000e+00> : vector<8xf32>
    %107 = vector.multi_reduction <add>, %106, %cst_40 [1] : vector<8x8xf32> to vector<8xf32>
    %108 = vector.shape_cast %107 : vector<8xf32> to vector<8x1xf32>
    %109 = vector.broadcast %108 : vector<8x1xf32> to vector<8x8xf32>
    %110 = arith.divf %106, %109 : vector<8x8xf32>
    %cst_41 = arith.constant dense<0.000000e+00> : vector<8x32xf32>
    %111 = tpu.matmul %110, %99, %cst_41 {dimension_numbers = #tpu.dot_dimension_numbers<[1], [0], [0], [1], [0, 0, 1, 1], [], []>} : vector<8x8xf32>, vector<8x32xf32>, vector<8x32xf32> -> vector<8x32xf32>
    %c0_42 = arith.constant 0 : index
    %c96 = arith.constant 96 : index
    %112 = vector.load %arg18[%c0_42, %c96] : memref<8x128xf32, #tpu.memory_space<vmem>>, vector<8x32xf32>
    tpu.vector_store %arg18[%c0_42, %c96], %111 {strides = array<i32>} : memref<8x128xf32, #tpu.memory_space<vmem>>, vector<8x32xf32>,
    %c0_43 = arith.constant 0 : index
    %c0_44 = arith.constant 0 : index
    %113 = vector.load %arg18[%c0_43, %c0_44] : memref<8x128xf32, #tpu.memory_space<vmem>>, vector<8x128xf32>
    %114 = arith.truncf %113 : vector<8x128xf32> to vector<8x128xbf16>
    %c0_45 = arith.constant 0 : index
    %c0_46 = arith.constant 0 : index
    %c0_47 = arith.constant 0 : index
    %115 = vector.load %arg7[%c0_45, %c0_46, %c0_47] : memref<1x128x128xbf16, #tpu.memory_space<vmem>>, vector<1x128x128xbf16>
    %116 = vector.shape_cast %115 : vector<1x128x128xbf16> to vector<128x128xbf16>
    %cst_48 = arith.constant dense<0.000000e+00> : vector<8x128xf32>
    %117 = tpu.matmul %114, %116, %cst_48 {dimension_numbers = #tpu.dot_dimension_numbers<[1], [0], [0], [1], [0, 0, 1, 1], [], []>} : vector<8x128xbf16>, vector<128x128xbf16>, vector<8x128xf32> -> vector<8x128xf32>
    %c0_49 = arith.constant 0 : index
    %c0_50 = arith.constant 0 : index
    %c0_51 = arith.constant 0 : index
    %118 = vector.load %arg8[%c0_49, %c0_50, %c0_51] : memref<1x1x128xf32, #tpu.memory_space<vmem>>, vector<1x1x128xf32>
    %119 = vector.shape_cast %118 : vector<1x1x128xf32> to vector<1x128xf32>
    %120 = vector.broadcast %119 : vector<1x128xf32> to vector<8x128xf32>
    %121 = arith.addf %117, %120 : vector<8x128xf32>
    %122 = arith.addf %3, %121 : vector<8x128xf32>
    %c0_52 = arith.constant 0 : index
    %c0_53 = arith.constant 0 : index
    %c0_54 = arith.constant 0 : index
    %123 = vector.load %arg9[%c0_52, %c0_53, %c0_54] : memref<1x1x128xf32, #tpu.memory_space<vmem>>, vector<1x1x128xf32>
    %124 = vector.shape_cast %123 : vector<1x1x128xf32> to vector<1x128xf32>
    %c0_55 = arith.constant 0 : index
    %c0_56 = arith.constant 0 : index
    %c0_57 = arith.constant 0 : index
    %125 = vector.load %arg10[%c0_55, %c0_56, %c0_57] : memref<1x1x128xf32, #tpu.memory_space<vmem>>, vector<1x1x128xf32>
    %126 = vector.shape_cast %125 : vector<1x1x128xf32> to vector<1x128xf32>
    %cst_58 = arith.constant dense<0.000000e+00> : vector<8xf32>
    %127 = vector.multi_reduction <add>, %122, %cst_58 [1] : vector<8x128xf32> to vector<8xf32>
    %128 = vector.shape_cast %127 : vector<8xf32> to vector<8x1xf32>
    %cst_59 = arith.constant 1.280000e+02 : f32
    %129 = vector.broadcast %cst_59 : f32 to vector<8x1xf32>
    %130 = arith.divf %128, %129 : vector<8x1xf32>
    %131 = arith.mulf %122, %122 : vector<8x128xf32>
    %cst_60 = arith.constant dense<0.000000e+00> : vector<8xf32>
    %132 = vector.multi_reduction <add>, %131, %cst_60 [1] : vector<8x128xf32> to vector<8xf32>
    %133 = vector.shape_cast %132 : vector<8xf32> to vector<8x1xf32>
    %cst_61 = arith.constant 1.280000e+02 : f32
    %134 = vector.broadcast %cst_61 : f32 to vector<8x1xf32>
    %135 = arith.divf %133, %134 : vector<8x1xf32>
    %136 = arith.mulf %130, %130 : vector<8x1xf32>
    %137 = arith.subf %135, %136 : vector<8x1xf32>
    %138 = vector.broadcast %130 : vector<8x1xf32> to vector<8x128xf32>
    %139 = arith.subf %122, %138 : vector<8x128xf32>
    %cst_62 = arith.constant 9.99999974E-6 : f32
    %140 = vector.broadcast %cst_62 : f32 to vector<8x1xf32>
    %141 = arith.addf %137, %140 : vector<8x1xf32>
    %142 = math.rsqrt %141 : vector<8x1xf32>
    %143 = vector.broadcast %142 : vector<8x1xf32> to vector<8x128xf32>
    %144 = arith.mulf %139, %143 : vector<8x128xf32>
    %145 = vector.broadcast %124 : vector<1x128xf32> to vector<8x128xf32>
    %146 = arith.mulf %144, %145 : vector<8x128xf32>
    %147 = vector.broadcast %126 : vector<1x128xf32> to vector<8x128xf32>
    %148 = arith.addf %146, %147 : vector<8x128xf32>
    %149 = arith.truncf %148 : vector<8x128xf32> to vector<8x128xbf16>
    %c0_63 = arith.constant 0 : index
    %c0_64 = arith.constant 0 : index
    %c0_65 = arith.constant 0 : index
    %150 = vector.load %arg11[%c0_63, %c0_64, %c0_65] : memref<1x128x512xbf16, #tpu.memory_space<vmem>>, vector<1x128x512xbf16>
    %151 = vector.shape_cast %150 : vector<1x128x512xbf16> to vector<128x512xbf16>
    %cst_66 = arith.constant dense<0.000000e+00> : vector<8x512xf32>
    %152 = tpu.matmul %149, %151, %cst_66 {dimension_numbers = #tpu.dot_dimension_numbers<[1], [0], [0], [1], [0, 0, 1, 1], [], []>} : vector<8x128xbf16>, vector<128x512xbf16>, vector<8x512xf32> -> vector<8x512xf32>
    %c0_67 = arith.constant 0 : index
    %c0_68 = arith.constant 0 : index
    %c0_69 = arith.constant 0 : index
    %153 = vector.load %arg12[%c0_67, %c0_68, %c0_69] : memref<1x1x512xf32, #tpu.memory_space<vmem>>, vector<1x1x512xf32>
    %154 = vector.shape_cast %153 : vector<1x1x512xf32> to vector<1x512xf32>
    %155 = vector.broadcast %154 : vector<1x512xf32> to vector<8x512xf32>
    %156 = arith.addf %152, %155 : vector<8x512xf32>
    %cst_70 = arith.constant 1.702000e+00 : f32
    %157 = vector.broadcast %cst_70 : f32 to vector<8x512xf32>
    %158 = arith.mulf %157, %156 : vector<8x512xf32>
    %159 = arith.negf %158 : vector<8x512xf32>
    %160 = math.exp %159 : vector<8x512xf32>
    %cst_71 = arith.constant 1.000000e+00 : f32
    %161 = vector.broadcast %cst_71 : f32 to vector<8x512xf32>
    %162 = arith.addf %161, %160 : vector<8x512xf32>
    %163 = arith.divf %161, %162 : vector<8x512xf32>
    %164 = arith.mulf %156, %163 : vector<8x512xf32>
    %165 = arith.truncf %164 : vector<8x512xf32> to vector<8x512xbf16>
    %c0_72 = arith.constant 0 : index
    %c0_73 = arith.constant 0 : index
    %c0_74 = arith.constant 0 : index
    %166 = vector.load %arg13[%c0_72, %c0_73, %c0_74] : memref<1x512x128xbf16, #tpu.memory_space<vmem>>, vector<1x512x128xbf16>
    %167 = vector.shape_cast %166 : vector<1x512x128xbf16> to vector<512x128xbf16>
    %cst_75 = arith.constant dense<0.000000e+00> : vector<8x128xf32>
    %168 = tpu.matmul %165, %167, %cst_75 {dimension_numbers = #tpu.dot_dimension_numbers<[1], [0], [0], [1], [0, 0, 1, 1], [], []>} : vector<8x512xbf16>, vector<512x128xbf16>, vector<8x128xf32> -> vector<8x128xf32>
    %169 = arith.addf %122, %168 : vector<8x128xf32>
    %c0_76 = arith.constant 0 : index
    %c0_77 = arith.constant 0 : index
    %c0_78 = arith.constant 0 : index
    %170 = vector.load %arg14[%c0_76, %c0_77, %c0_78] : memref<1x1x128xf32, #tpu.memory_space<vmem>>, vector<1x1x128xf32>
    %171 = vector.shape_cast %170 : vector<1x1x128xf32> to vector<1x128xf32>
    %172 = vector.broadcast %171 : vector<1x128xf32> to vector<8x128xf32>
    %173 = arith.addf %169, %172 : vector<8x128xf32>
    %c0_79 = arith.constant 0 : index
    %c0_80 = arith.constant 0 : index
    %174 = vector.load %arg17[%c0_79, %c0_80] : memref<8x128xf32, #tpu.memory_space<vmem>>, vector<8x128xf32>
    tpu.vector_store %arg17[%c0_79, %c0_80], %173 {strides = array<i32>} : memref<8x128xf32, #tpu.memory_space<vmem>>, vector<8x128xf32>,
    %c1_i32 = arith.constant 1 : i32
    %175 = arith.cmpi eq, %arg1, %c1_i32 : i32
    %176 = arith.extui %175 : i1 to i32
    %c0_i32_81 = arith.constant 0 : i32
    %177 = arith.cmpi ne, %176, %c0_i32_81 : i32
    scf.if %177 {
      %c0_82 = arith.constant 0 : index
      %c0_83 = arith.constant 0 : index
      %178 = vector.load %arg15[%c0_82, %c0_83] : memref<1x128xf32, #tpu.memory_space<vmem>>, vector<1x128xf32>
      %c0_84 = arith.constant 0 : index
      %c0_85 = arith.constant 0 : index
      %179 = vector.load %arg16[%c0_84, %c0_85] : memref<1x128xf32, #tpu.memory_space<vmem>>, vector<1x128xf32>
      %cst_86 = arith.constant dense<0.000000e+00> : vector<8xf32>
      %180 = vector.multi_reduction <add>, %173, %cst_86 [1] : vector<8x128xf32> to vector<8xf32>
      %181 = vector.shape_cast %180 : vector<8xf32> to vector<8x1xf32>
      %cst_87 = arith.constant 1.280000e+02 : f32
      %182 = vector.broadcast %cst_87 : f32 to vector<8x1xf32>
      %183 = arith.divf %181, %182 : vector<8x1xf32>
      %184 = arith.mulf %173, %173 : vector<8x128xf32>
      %cst_88 = arith.constant dense<0.000000e+00> : vector<8xf32>
      %185 = vector.multi_reduction <add>, %184, %cst_88 [1] : vector<8x128xf32> to vector<8xf32>
      %186 = vector.shape_cast %185 : vector<8xf32> to vector<8x1xf32>
      %cst_89 = arith.constant 1.280000e+02 : f32
      %187 = vector.broadcast %cst_89 : f32 to vector<8x1xf32>
      %188 = arith.divf %186, %187 : vector<8x1xf32>
      %189 = arith.mulf %183, %183 : vector<8x1xf32>
      %190 = arith.subf %188, %189 : vector<8x1xf32>
      %191 = vector.broadcast %183 : vector<8x1xf32> to vector<8x128xf32>
      %192 = arith.subf %173, %191 : vector<8x128xf32>
      %cst_90 = arith.constant 9.99999974E-6 : f32
      %193 = vector.broadcast %cst_90 : f32 to vector<8x1xf32>
      %194 = arith.addf %190, %193 : vector<8x1xf32>
      %195 = math.rsqrt %194 : vector<8x1xf32>
      %196 = vector.broadcast %195 : vector<8x1xf32> to vector<8x128xf32>
      %197 = arith.mulf %192, %196 : vector<8x128xf32>
      %198 = vector.broadcast %178 : vector<1x128xf32> to vector<8x128xf32>
      %199 = arith.mulf %197, %198 : vector<8x128xf32>
      %200 = vector.broadcast %179 : vector<1x128xf32> to vector<8x128xf32>
      %201 = arith.addf %199, %200 : vector<8x128xf32>
      %c0_91 = arith.constant 0 : index
      %c0_92 = arith.constant 0 : index
      %202 = vector.load %arg17[%c0_91, %c0_92] : memref<8x128xf32, #tpu.memory_space<vmem>>, vector<8x128xf32>
      tpu.vector_store %arg17[%c0_91, %c0_92], %201 {strides = array<i32>} : memref<8x128xf32, #tpu.memory_space<vmem>>, vector<8x128xf32>,
    } else {
    }
    return
  }
  func.func @transform_0(%arg0: i32, %arg1: i32) -> (i32, i32) {
    %c0_i32 = arith.constant 0 : i32
    %c0_i32_0 = arith.constant 0 : i32
    return %arg0, %c0_i32 : i32, i32
  }
  func.func @transform_1(%arg0: i32, %arg1: i32) -> (i32, i32, i32) {
    %c0_i32 = arith.constant 0 : i32
    %c0_i32_0 = arith.constant 0 : i32
    %c0_i32_1 = arith.constant 0 : i32
    return %arg1, %c0_i32, %c0_i32_0 : i32, i32, i32
  }
  func.func @transform_2(%arg0: i32, %arg1: i32) -> (i32, i32, i32) {
    %c0_i32 = arith.constant 0 : i32
    %c0_i32_0 = arith.constant 0 : i32
    %c0_i32_1 = arith.constant 0 : i32
    return %arg1, %c0_i32, %c0_i32_0 : i32, i32, i32
  }
  func.func @transform_3(%arg0: i32, %arg1: i32) -> (i32, i32, i32) {
    %c0_i32 = arith.constant 0 : i32
    %c0_i32_0 = arith.constant 0 : i32
    %c0_i32_1 = arith.constant 0 : i32
    return %arg1, %c0_i32, %c0_i32_0 : i32, i32, i32
  }
  func.func @transform_4(%arg0: i32, %arg1: i32) -> (i32, i32, i32) {
    %c0_i32 = arith.constant 0 : i32
    %c0_i32_0 = arith.constant 0 : i32
    %c0_i32_1 = arith.constant 0 : i32
    return %arg1, %c0_i32, %c0_i32_0 : i32, i32, i32
  }
  func.func @transform_5(%arg0: i32, %arg1: i32) -> (i32, i32, i32) {
    %c0_i32 = arith.constant 0 : i32
    %c0_i32_0 = arith.constant 0 : i32
    %c0_i32_1 = arith.constant 0 : i32
    return %arg1, %c0_i32, %c0_i32_0 : i32, i32, i32
  }
  func.func @transform_6(%arg0: i32, %arg1: i32) -> (i32, i32, i32) {
    %c0_i32 = arith.constant 0 : i32
    %c0_i32_0 = arith.constant 0 : i32
    %c0_i32_1 = arith.constant 0 : i32
    return %arg1, %c0_i32, %c0_i32_0 : i32, i32, i32
  }
  func.func @transform_7(%arg0: i32, %arg1: i32) -> (i32, i32, i32) {
    %c0_i32 = arith.constant 0 : i32
    %c0_i32_0 = arith.constant 0 : i32
    %c0_i32_1 = arith.constant 0 : i32
    return %arg1, %c0_i32, %c0_i32_0 : i32, i32, i32
  }
  func.func @transform_8(%arg0: i32, %arg1: i32) -> (i32, i32, i32) {
    %c0_i32 = arith.constant 0 : i32
    %c0_i32_0 = arith.constant 0 : i32
    %c0_i32_1 = arith.constant 0 : i32
    return %arg1, %c0_i32, %c0_i32_0 : i32, i32, i32
  }
  func.func @transform_9(%arg0: i32, %arg1: i32) -> (i32, i32, i32) {
    %c0_i32 = arith.constant 0 : i32
    %c0_i32_0 = arith.constant 0 : i32
    %c0_i32_1 = arith.constant 0 : i32
    return %arg1, %c0_i32, %c0_i32_0 : i32, i32, i32
  }
  func.func @transform_10(%arg0: i32, %arg1: i32) -> (i32, i32, i32) {
    %c0_i32 = arith.constant 0 : i32
    %c0_i32_0 = arith.constant 0 : i32
    %c0_i32_1 = arith.constant 0 : i32
    return %arg1, %c0_i32, %c0_i32_0 : i32, i32, i32
  }
  func.func @transform_11(%arg0: i32, %arg1: i32) -> (i32, i32, i32) {
    %c0_i32 = arith.constant 0 : i32
    %c0_i32_0 = arith.constant 0 : i32
    %c0_i32_1 = arith.constant 0 : i32
    return %arg1, %c0_i32, %c0_i32_0 : i32, i32, i32
  }
  func.func @transform_12(%arg0: i32, %arg1: i32) -> (i32, i32, i32) {
    %c0_i32 = arith.constant 0 : i32
    %c0_i32_0 = arith.constant 0 : i32
    %c0_i32_1 = arith.constant 0 : i32
    return %arg1, %c0_i32, %c0_i32_0 : i32, i32, i32
  }
  func.func @transform_13(%arg0: i32, %arg1: i32) -> (i32, i32) {
    %c0_i32 = arith.constant 0 : i32
    %c0_i32_0 = arith.constant 0 : i32
    %c0_i32_1 = arith.constant 0 : i32
    return %c0_i32, %c0_i32_0 : i32, i32
  }
  func.func @transform_14(%arg0: i32, %arg1: i32) -> (i32, i32) {
    %c0_i32 = arith.constant 0 : i32
    %c0_i32_0 = arith.constant 0 : i32
    %c0_i32_1 = arith.constant 0 : i32
    return %c0_i32, %c0_i32_0 : i32, i32
  }
  func.func @transform_15(%arg0: i32, %arg1: i32) -> (i32, i32) {
    %c0_i32 = arith.constant 0 : i32
    %c0_i32_0 = arith.constant 0 : i32
    return %arg0, %c0_i32 : i32, i32
  }
}

</mosaic_0001>

<llo_original>
// kernel: text_encoder_forward.1
$region0: #{text_encoder_forward.1}
  #allocation0 [shape = 'u32[]', space=smem, size = 0x4, offset = 0x4, fixed_abs, tag = 'smem constant byte address 0x4 - core index']
  #allocation1 [shape = 'u32[144,128]{1,0:T(1,128)}', space=vmem, size = 0x12000, scoped, tag = 'internal scratch']
  #allocation2 [shape = 'f32[8,128]{1,0:T(8,128)}', space=vmem, size = 0x1000, scoped, tag = 'scratch operand']
  %s0 = inlined_call_operand.vmem [shape: f32[16,128], index: 0, kind: input, shape index: {}]
  %s1 = inlined_call_operand.vmem [shape: f32[2,1,128], index: 1, kind: input, shape index: {}]
  %s2 = inlined_call_operand.vmem [shape: f32[2,1,128], index: 2, kind: input, shape index: {}]
  %s3 = inlined_call_operand.hbm [shape: bf16[2,128,384], index: 3, kind: input, shape index: {}]
  %s4 = inlined_call_operand.vmem [shape: f32[2,1,384], index: 4, kind: input, shape index: {}]
  %s5 = inlined_call_operand.vmem [shape: bf16[2,128,128], index: 5, kind: input, shape index: {}]
  %s6 = inlined_call_operand.vmem [shape: f32[2,1,128], index: 6, kind: input, shape index: {}]
  %s7 = inlined_call_operand.vmem [shape: f32[2,1,128], index: 7, kind: input, shape index: {}]
  %s8 = inlined_call_operand.vmem [shape: f32[2,1,128], index: 8, kind: input, shape index: {}]
  %s9 = inlined_call_operand.hbm [shape: bf16[2,128,512], index: 9, kind: input, shape index: {}]
  %s10 = inlined_call_operand.vmem [shape: f32[2,1,512], index: 10, kind: input, shape index: {}]
  %s11 = inlined_call_operand.hbm [shape: bf16[2,512,128], index: 11, kind: input, shape index: {}]
  %s12 = inlined_call_operand.vmem [shape: f32[2,1,128], index: 12, kind: input, shape index: {}]
  %s13 = inlined_call_operand.vmem [shape: f32[1,128], index: 13, kind: input, shape index: {}]
  %s14 = inlined_call_operand.vmem [shape: f32[1,128], index: 14, kind: input, shape index: {}]
  %s15 = inlined_call_operand.hbm [shape: f32[16,128], index: 15, kind: output, shape index: {}]
  %s16 = sld [smem:[#allocation0]]
  $region113: #{text_encoder_forward.1} parent=0
    _
  %s18 = ssub.s32 1, %s16
  %s19 = scalar_select 0, %s18, %s16
  $region1: #{text_encoder_forward.1} parent=0
    #allocation3 [shape = 'u8[196608]{0}', space=vmem, size = 0x30000, scoped, tag = 'input window, operand 3']
    #allocation4 [shape = 's32[2]{0}', space=sflag, size = 0x8, scoped, tag = 'scoped memory for text_encoder_forward.1']
    #allocation5 [shape = 's32[2]{0}', space=sflag, size = 0x8, scoped, tag = 'scoped memory for text_encoder_forward.1']
    #allocation6 [shape = 'u8[262144]{0}', space=vmem, size = 0x40000, scoped, tag = 'input window, operand 9']
    #allocation7 [shape = 's32[2]{0}', space=sflag, size = 0x8, scoped, tag = 'scoped memory for text_encoder_forward.1']
    #allocation8 [shape = 'u8[262144]{0}', space=vmem, size = 0x40000, scoped, tag = 'input window, operand 11']
    #allocation9 [shape = 'u8[8192]{0}', space=vmem, size = 0x2000, scoped, tag = 'output window, operand 0']
    %20 = vsyncpa [#allocation4], 0
    %s21 = scalar_lea.sflag [#allocation4], 1
    %22 = vsyncpa %s21, 0
    %23 = vsyncpa [#allocation7], 0
    %s24 = scalar_lea.sflag [#allocation7], 1
    %25 = vsyncpa %s24, 0
    %26 = vsyncpa [#allocation5], 0
    %s27 = scalar_lea.sflag [#allocation5], 1
    %28 = vsyncpa %s27, 0
    loop: start=0, step=1, limit=6
    $region2: #{text_encoder_forward.1} parent=1 // loop_pre_header
      _
    $region3: #{text_encoder_forward.1} parent=1 // loop_header
      %s30 = sphi 0, %s34
      %p31 = scmp.ge.s32.totalorder %s30, 6
      %s37 = sphi 0, %s49
      %s38 = sphi 0, %s45
      %s39 = sphi 0, %s37
      %s40 = sphi 0, %s38
      %s41 = sphi 0, %s39
      %s42 = sphi 0, %s40
      %s52 = sphi 0, %s54
      %s55 = sphi 0, %s52
      %s56 = sphi 0, %s55
      %s72 = sphi 0, %s56
      %s78 = sphi 0, %s80
      %s81 = sphi 0, %s78
      %s82 = sphi 0, %s81
      %s98 = sphi 0, %s82
      %s104 = sphi 0, %s106
      %s107 = sphi 0, %s104
      %s108 = sphi 0, %s107
      %s124 = sphi 0, %s108
      %s130 = sphi 0, %s132
      %s133 = sphi 0, %s130
      %s134 = sphi 0, %s133
      %s150 = sphi 0, %s134
      %s156 = sphi 0, %s158
      %s159 = sphi 0, %s156
      %s160 = sphi 0, %s159
      %s176 = sphi 0, %s160
      %s182 = sphi 0, %s184
      %s185 = sphi 0, %s182
      %s186 = sphi 0, %s185
      %s202 = sphi 0, %s186
      %s208 = sphi 0, %s210
      %s211 = sphi 0, %s208
      %s212 = sphi 0, %s211
      %s228 = sphi 0, %s212
      %s234 = sphi 0, %s236
      %s237 = sphi 0, %s234
      %s238 = sphi 0, %s237
      %s254 = sphi 0, %s238
      %s260 = sphi 0, %s262
      %s263 = sphi 0, %s260
      %s264 = sphi 0, %s263
      %s280 = sphi 0, %s264
      %s286 = sphi 0, %s288
      %s289 = sphi 0, %s286
      %s290 = sphi 0, %s289
      %s306 = sphi 0, %s290
      %s312 = sphi 0, %s314
      %s315 = sphi 0, %s312
      %s316 = sphi 0, %s315
      %s332 = sphi 0, %s316
      %s338 = sphi 0, %s340
      %s341 = sphi 0, %s338
      %s342 = sphi 0, %s341
      %s358 = sphi 0, %s342
      %s364 = sphi 0, %s366
      %s367 = sphi 0, %s364
      %s368 = sphi 0, %s367
      %s384 = sphi 0, %s368
      %s388 = sphi 0, %s388
      %s390 = sphi 0, %s388
      %s391 = sphi 0, %s390
      %s405 = sphi 0, %s391
      %s409 = sphi 0, %s409
      %s411 = sphi 0, %s409
      %s412 = sphi 0, %s411
      %s426 = sphi 0, %s412
      %s432 = sphi 0, %s434
      %s435 = sphi 0, %s432
      %s436 = sphi 0, %s435
      %s452 = sphi 0, %s436
    $region4: #{text_encoder_forward.1} parent=1 // loop_header_branch
      %33 = sbr.rel (%p31) target = $region8
    $region5: #{text_encoder_forward.1} parent=1 // loop_body
      %s35 = ssub.s32 %s30, 1
      %s36 = ssub.s32 %s30, 2
      %s43 = sadd.s32 1, %s38
      %p44 = scmp.ge.s32.totalorder %s43, 2
      %s45 = scalar_select %p44, 0, %s43
      %s46 = sadd.s32 1, %s37
      %s47 = scalar_select %p44, %s46, %s37
      %p48 = scmp.ge.s32.totalorder %s47, 2
      %s49 = scalar_select %p48, 0, %s47
      %s50 = ssub.s32 %s37, %s49
      %p51 = scmp.eq.s32.totalorder %s50, 0
      %s53 = sadd.s32 %s52, 1
      %s54 = scalar_select %p51, %s52, %s53
      %p57 = pneg %p51
      %p58 = scmp.eq.s32.totalorder %s30, 3
      %p59 = por %p57, %p58
      %p60 = scmp.ne.s32.totalorder %s52, %s55
      %p61 = scmp.eq.s32.totalorder %s30, 0
      %p62 = por %p60, %p61
      %p63 = scmp.ne.s32.totalorder %s52, %s55
      %p64 = scmp.eq.s32.totalorder %s35, 3
      %p65 = por %p63, %p64
      %p66 = scmp.ne.s32.totalorder %s55, %s56
      %p67 = scmp.eq.s32.totalorder %s35, 0
      %p68 = por %p66, %p67
      %p69 = scmp.ne.s32.totalorder %s55, %s56
      %p70 = scmp.eq.s32.totalorder %s36, 3
      %p71 = por %p69, %p70
      %p73 = scmp.ne.s32.totalorder %s56, %s72
      %p74 = scmp.eq.s32.totalorder %s36, 0
      %p75 = por %p73, %p74
      %s76 = ssub.s32 %s38, %s45
      %p77 = scmp.eq.s32.totalorder %s76, 0
      %s79 = sadd.s32 %s78, 1
      %s80 = scalar_select %p77, %s78, %s79
      %p83 = pneg %p77
      %p84 = scmp.eq.s32.totalorder %s30, 3
      %p85 = por %p83, %p84
      %p86 = scmp.ne.s32.totalorder %s78, %s81
      %p87 = scmp.eq.s32.totalorder %s30, 0
      %p88 = por %p86, %p87
      %p89 = scmp.ne.s32.totalorder %s78, %s81
      %p90 = scmp.eq.s32.totalorder %s35, 3
      %p91 = por %p89, %p90
      %p92 = scmp.ne.s32.totalorder %s81, %s82
      %p93 = scmp.eq.s32.totalorder %s35, 0
      %p94 = por %p92, %p93
      %p95 = scmp.ne.s32.totalorder %s81, %s82
      %p96 = scmp.eq.s32.totalorder %s36, 3
      %p97 = por %p95, %p96
      %p99 = scmp.ne.s32.totalorder %s82, %s98
      %p100 = scmp.eq.s32.totalorder %s36, 0
      %p101 = por %p99, %p100
      %s102 = ssub.s32 %s38, %s45
      %p103 = scmp.eq.s32.totalorder %s102, 0
      %s105 = sadd.s32 %s104, 1
      %s106 = scalar_select %p103, %s104, %s105
      %p109 = pneg %p103
      %p110 = scmp.eq.s32.totalorder %s30, 3
      %p111 = por %p109, %p110
      %p112 = scmp.ne.s32.totalorder %s104, %s107
      %p113 = scmp.eq.s32.totalorder %s30, 0
      %p114 = por %p112, %p113
      %p115 = scmp.ne.s32.totalorder %s104, %s107
      %p116 = scmp.eq.s32.totalorder %s35, 3
      %p117 = por %p115, %p116
      %p118 = scmp.ne.s32.totalorder %s107, %s108
      %p119 = scmp.eq.s32.totalorder %s35, 0
      %p120 = por %p118, %p119
      %p121 = scmp.ne.s32.totalorder %s107, %s108
      %p122 = scmp.eq.s32.totalorder %s36, 3
      %p123 = por %p121, %p122
      %p125 = scmp.ne.s32.totalorder %s108, %s124
      %p126 = scmp.eq.s32.totalorder %s36, 0
      %p127 = por %p125, %p126
      %s128 = ssub.s32 %s38, %s45
      %p129 = scmp.eq.s32.totalorder %s128, 0
      %s131 = sadd.s32 %s130, 1
      %s132 = scalar_select %p129, %s130, %s131
      %p135 = pneg %p129
      %p136 = scmp.eq.s32.totalorder %s30, 3
      %p137 = por %p135, %p136
      %p138 = scmp.ne.s32.totalorder %s130, %s133
      %p139 = scmp.eq.s32.totalorder %s30, 0
      %p140 = por %p138, %p139
      %p141 = scmp.ne.s32.totalorder %s130, %s133
      %p142 = scmp.eq.s32.totalorder %s35, 3
      %p143 = por %p141, %p142
      %p144 = scmp.ne.s32.totalorder %s133, %s134
      %p145 = scmp.eq.s32.totalorder %s35, 0
      %p146 = por %p144, %p145
      %p147 = scmp.ne.s32.totalorder %s133, %s134
      %p148 = scmp.eq.s32.totalorder %s36, 3
      %p149 = por %p147, %p148
      %p151 = scmp.ne.s32.totalorder %s134, %s150
      %p152 = scmp.eq.s32.totalorder %s36, 0
      %p153 = por %p151, %p152
      %s154 = ssub.s32 %s38, %s45
      %p155 = scmp.eq.s32.totalorder %s154, 0
      %s157 = sadd.s32 %s156, 1
      %s158 = scalar_select %p155, %s156, %s157
      %p161 = pneg %p155
      %p162 = scmp.eq.s32.totalorder %s30, 3
      %p163 = por %p161, %p162
      %p164 = scmp.ne.s32.totalorder %s156, %s159
      %p165 = scmp.eq.s32.totalorder %s30, 0
      %p166 = por %p164, %p165
      %p167 = scmp.ne.s32.totalorder %s156, %s159
      %p168 = scmp.eq.s32.totalorder %s35, 3
      %p169 = por %p167, %p168
      %p170 = scmp.ne.s32.totalorder %s159, %s160
      %p171 = scmp.eq.s32.totalorder %s35, 0
      %p172 = por %p170, %p171
      %p173 = scmp.ne.s32.totalorder %s159, %s160
      %p174 = scmp.eq.s32.totalorder %s36, 3
      %p175 = por %p173, %p174
      %p177 = scmp.ne.s32.totalorder %s160, %s176
      %p178 = scmp.eq.s32.totalorder %s36, 0
      %p179 = por %p177, %p178
      %s180 = ssub.s32 %s38, %s45
      %p181 = scmp.eq.s32.totalorder %s180, 0
      %s183 = sadd.s32 %s182, 1
      %s184 = scalar_select %p181, %s182, %s183
      %p187 = pneg %p181
      %p188 = scmp.eq.s32.totalorder %s30, 3
      %p189 = por %p187, %p188
      %p190 = scmp.ne.s32.totalorder %s182, %s185
      %p191 = scmp.eq.s32.totalorder %s30, 0
      %p192 = por %p190, %p191
      %p193 = scmp.ne.s32.totalorder %s182, %s185
      %p194 = scmp.eq.s32.totalorder %s35, 3
      %p195 = por %p193, %p194
      %p196 = scmp.ne.s32.totalorder %s185, %s186
      %p197 = scmp.eq.s32.totalorder %s35, 0
      %p198 = por %p196, %p197
      %p199 = scmp.ne.s32.totalorder %s185, %s186
      %p200 = scmp.eq.s32.totalorder %s36, 3
      %p201 = por %p199, %p200
      %p203 = scmp.ne.s32.totalorder %s186, %s202
      %p204 = scmp.eq.s32.totalorder %s36, 0
      %p205 = por %p203, %p204
      %s206 = ssub.s32 %s38, %s45
      %p207 = scmp.eq.s32.totalorder %s206, 0
      %s209 = sadd.s32 %s208, 1
      %s210 = scalar_select %p207, %s208, %s209
      %p213 = pneg %p207
      %p214 = scmp.eq.s32.totalorder %s30, 3
      %p215 = por %p213, %p214
      %p216 = scmp.ne.s32.totalorder %s208, %s211
      %p217 = scmp.eq.s32.totalorder %s30, 0
      %p218 = por %p216, %p217
      %p219 = scmp.ne.s32.totalorder %s208, %s211
      %p220 = scmp.eq.s32.totalorder %s35, 3
      %p221 = por %p219, %p220
      %p222 = scmp.ne.s32.totalorder %s211, %s212
      %p223 = scmp.eq.s32.totalorder %s35, 0
      %p224 = por %p222, %p223
      %p225 = scmp.ne.s32.totalorder %s211, %s212
      %p226 = scmp.eq.s32.totalorder %s36, 3
      %p227 = por %p225, %p226
      %p229 = scmp.ne.s32.totalorder %s212, %s228
      %p230 = scmp.eq.s32.totalorder %s36, 0
      %p231 = por %p229, %p230
      %s232 = ssub.s32 %s38, %s45
      %p233 = scmp.eq.s32.totalorder %s232, 0
      %s235 = sadd.s32 %s234, 1
      %s236 = scalar_select %p233, %s234, %s235
      %p239 = pneg %p233
      %p240 = scmp.eq.s32.totalorder %s30, 3
      %p241 = por %p239, %p240
      %p242 = scmp.ne.s32.totalorder %s234, %s237
      %p243 = scmp.eq.s32.totalorder %s30, 0
      %p244 = por %p242, %p243
      %p245 = scmp.ne.s32.totalorder %s234, %s237
      %p246 = scmp.eq.s32.totalorder %s35, 3
      %p247 = por %p245, %p246
      %p248 = scmp.ne.s32.totalorder %s237, %s238
      %p249 = scmp.eq.s32.totalorder %s35, 0
      %p250 = por %p248, %p249
      %p251 = scmp.ne.s32.totalorder %s237, %s238
      %p252 = scmp.eq.s32.totalorder %s36, 3
      %p253 = por %p251, %p252
      %p255 = scmp.ne.s32.totalorder %s238, %s254
      %p256 = scmp.eq.s32.totalorder %s36, 0
      %p257 = por %p255, %p256
      %s258 = ssub.s32 %s38, %s45
      %p259 = scmp.eq.s32.totalorder %s258, 0
      %s261 = sadd.s32 %s260, 1
      %s262 = scalar_select %p259, %s260, %s261
      %p265 = pneg %p259
      %p266 = scmp.eq.s32.totalorder %s30, 3
      %p267 = por %p265, %p266
      %p268 = scmp.ne.s32.totalorder %s260, %s263
      %p269 = scmp.eq.s32.totalorder %s30, 0
      %p270 = por %p268, %p269
      %p271 = scmp.ne.s32.totalorder %s260, %s263
      %p272 = scmp.eq.s32.totalorder %s35, 3
      %p273 = por %p271, %p272
      %p274 = scmp.ne.s32.totalorder %s263, %s264
      %p275 = scmp.eq.s32.totalorder %s35, 0
      %p276 = por %p274, %p275
      %p277 = scmp.ne.s32.totalorder %s263, %s264
      %p278 = scmp.eq.s32.totalorder %s36, 3
      %p279 = por %p277, %p278
      %p281 = scmp.ne.s32.totalorder %s264, %s280
      %p282 = scmp.eq.s32.totalorder %s36, 0
      %p283 = por %p281, %p282
      %s284 = ssub.s32 %s38, %s45
      %p285 = scmp.eq.s32.totalorder %s284, 0
      %s287 = sadd.s32 %s286, 1
      %s288 = scalar_select %p285, %s286, %s287
      %p291 = pneg %p285
      %p292 = scmp.eq.s32.totalorder %s30, 3
      %p293 = por %p291, %p292
      %p294 = scmp.ne.s32.totalorder %s286, %s289
      %p295 = scmp.eq.s32.totalorder %s30, 0
      %p296 = por %p294, %p295
      %p297 = scmp.ne.s32.totalorder %s286, %s289
      %p298 = scmp.eq.s32.totalorder %s35, 3
      %p299 = por %p297, %p298
      %p300 = scmp.ne.s32.totalorder %s289, %s290
      %p301 = scmp.eq.s32.totalorder %s35, 0
      %p302 = por %p300, %p301
      %p303 = scmp.ne.s32.totalorder %s289, %s290
      %p304 = scmp.eq.s32.totalorder %s36, 3
      %p305 = por %p303, %p304
      %p307 = scmp.ne.s32.totalorder %s290, %s306
      %p308 = scmp.eq.s32.totalorder %s36, 0
      %p309 = por %p307, %p308
      %s310 = ssub.s32 %s38, %s45
      %p311 = scmp.eq.s32.totalorder %s310, 0
      %s313 = sadd.s32 %s312, 1
      %s314 = scalar_select %p311, %s312, %s313
      %p317 = pneg %p311
      %p318 = scmp.eq.s32.totalorder %s30, 3
      %p319 = por %p317, %p318
      %p320 = scmp.ne.s32.totalorder %s312, %s315
      %p321 = scmp.eq.s32.totalorder %s30, 0
      %p322 = por %p320, %p321
      %p323 = scmp.ne.s32.totalorder %s312, %s315
      %p324 = scmp.eq.s32.totalorder %s35, 3
      %p325 = por %p323, %p324
      %p326 = scmp.ne.s32.totalorder %s315, %s316
      %p327 = scmp.eq.s32.totalorder %s35, 0
      %p328 = por %p326, %p327
      %p329 = scmp.ne.s32.totalorder %s315, %s316
      %p330 = scmp.eq.s32.totalorder %s36, 3
      %p331 = por %p329, %p330
      %p333 = scmp.ne.s32.totalorder %s316, %s332
      %p334 = scmp.eq.s32.totalorder %s36, 0
      %p335 = por %p333, %p334
      %s336 = ssub.s32 %s38, %s45
      %p337 = scmp.eq.s32.totalorder %s336, 0
      %s339 = sadd.s32 %s338, 1
      %s340 = scalar_select %p337, %s338, %s339
      %p343 = pneg %p337
      %p344 = scmp.eq.s32.totalorder %s30, 3
      %p345 = por %p343, %p344
      %p346 = scmp.ne.s32.totalorder %s338, %s341
      %p347 = scmp.eq.s32.totalorder %s30, 0
      %p348 = por %p346, %p347
      %p349 = scmp.ne.s32.totalorder %s338, %s341
      %p350 = scmp.eq.s32.totalorder %s35, 3
      %p351 = por %p349, %p350
      %p352 = scmp.ne.s32.totalorder %s341, %s342
      %p353 = scmp.eq.s32.totalorder %s35, 0
      %p354 = por %p352, %p353
      %p355 = scmp.ne.s32.totalorder %s341, %s342
      %p356 = scmp.eq.s32.totalorder %s36, 3
      %p357 = por %p355, %p356
      %p359 = scmp.ne.s32.totalorder %s342, %s358
      %p360 = scmp.eq.s32.totalorder %s36, 0
      %p361 = por %p359, %p360
      %s362 = ssub.s32 %s38, %s45
      %p363 = scmp.eq.s32.totalorder %s362, 0
      %s365 = sadd.s32 %s364, 1
      %s366 = scalar_select %p363, %s364, %s365
      %p369 = pneg %p363
      %p370 = scmp.eq.s32.totalorder %s30, 3
      %p371 = por %p369, %p370
      %p372 = scmp.ne.s32.totalorder %s364, %s367
      %p373 = scmp.eq.s32.totalorder %s30, 0
      %p374 = por %p372, %p373
      %p375 = scmp.ne.s32.totalorder %s364, %s367
      %p376 = scmp.eq.s32.totalorder %s35, 3
      %p377 = por %p375, %p376
      %p378 = scmp.ne.s32.totalorder %s367, %s368
      %p379 = scmp.eq.s32.totalorder %s35, 0
      %p380 = por %p378, %p379
      %p381 = scmp.ne.s32.totalorder %s367, %s368
      %p382 = scmp.eq.s32.totalorder %s36, 3
      %p383 = por %p381, %p382
      %p385 = scmp.ne.s32.totalorder %s368, %s384
      %p386 = scmp.eq.s32.totalorder %s36, 0
      %p387 = por %p385, %p386
      %s389 = sadd.s32 %s388, 1
      %p392 = scmp.eq.s32.totalorder %s30, 3
      %p393 = scmp.ne.s32.totalorder %s388, %s390
      %p394 = scmp.eq.s32.totalorder %s30, 0
      %p395 = por %p393, %p394
      %p396 = scmp.ne.s32.totalorder %s388, %s390
      %p397 = scmp.eq.s32.totalorder %s35, 3
      %p398 = por %p396, %p397
      %p399 = scmp.ne.s32.totalorder %s390, %s391
      %p400 = scmp.eq.s32.totalorder %s35, 0
      %p401 = por %p399, %p400
      %p402 = scmp.ne.s32.totalorder %s390, %s391
      %p403 = scmp.eq.s32.totalorder %s36, 3
      %p404 = por %p402, %p403
      %p406 = scmp.ne.s32.totalorder %s391, %s405
      %p407 = scmp.eq.s32.totalorder %s36, 0
      %p408 = por %p406, %p407
      %s410 = sadd.s32 %s409, 1
      %p413 = scmp.eq.s32.totalorder %s30, 3
      %p414 = scmp.ne.s32.totalorder %s409, %s411
      %p415 = scmp.eq.s32.totalorder %s30, 0
      %p416 = por %p414, %p415
      %p417 = scmp.ne.s32.totalorder %s409, %s411
      %p418 = scmp.eq.s32.totalorder %s35, 3
      %p419 = por %p417, %p418
      %p420 = scmp.ne.s32.totalorder %s411, %s412
      %p421 = scmp.eq.s32.totalorder %s35, 0
      %p422 = por %p420, %p421
      %p423 = scmp.ne.s32.totalorder %s411, %s412
      %p424 = scmp.eq.s32.totalorder %s36, 3
      %p425 = por %p423, %p424
      %p427 = scmp.ne.s32.totalorder %s412, %s426
      %p428 = scmp.eq.s32.totalorder %s36, 0
      %p429 = por %p427, %p428
      %s430 = ssub.s32 %s37, %s49
      %p431 = scmp.eq.s32.totalorder %s430, 0
      %s433 = sadd.s32 %s432, 1
      %s434 = scalar_select %p431, %s432, %s433
      %p437 = pneg %p431
      %p438 = scmp.eq.s32.totalorder %s30, 3
      %p439 = por %p437, %p438
      %p440 = scmp.ne.s32.totalorder %s432, %s435
      %p441 = scmp.eq.s32.totalorder %s30, 0
      %p442 = por %p440, %p441
      %p443 = scmp.ne.s32.totalorder %s432, %s435
      %p444 = scmp.eq.s32.totalorder %s35, 3
      %p445 = por %p443, %p444
      %p446 = scmp.ne.s32.totalorder %s435, %s436
      %p447 = scmp.eq.s32.totalorder %s35, 0
      %p448 = por %p446, %p447
      %p449 = scmp.ne.s32.totalorder %s435, %s436
      %p450 = scmp.eq.s32.totalorder %s36, 3
      %p451 = por %p449, %p450
      %p453 = scmp.ne.s32.totalorder %s436, %s452
      %p454 = scmp.eq.s32.totalorder %s36, 0
      %p455 = por %p453, %p454
      %p456 = scmp.le.s32.totalorder 1, %s30
      %p457 = scmp.lt.s32.totalorder %s30, 5
      %p458 = pnand %p456, %p457
      %p459 = pneg %p458
      // Predicated region
      $region9: #{text_encoder_forward.1} parent=5 // pred_check
        _
      $region10: #{text_encoder_forward.1} parent=5 // pred_check_branch
        %461 = sbr.rel (%p458) target = $region12
      $region11: #{text_encoder_forward.1} parent=5 // pred_region
        %s462 = ssub.s32 %s30, 1
        // Predicated region
        $region13: #{text_encoder_forward.1} parent=11 // pred_check
          %p463 = pneg %p401
        $region14: #{text_encoder_forward.1} parent=11 // pred_check_branch
          %465 = sbr.rel (%p463) target = $region16
        $region15: #{text_encoder_forward.1} parent=11 // pred_region
          _
        $region16: #{text_encoder_forward.1} parent=11 // pred_fallthru
          _
        // Predicated region
        $region17: #{text_encoder_forward.1} parent=11 // pred_check
          %p466 = pneg %p422
        $region18: #{text_encoder_forward.1} parent=11 // pred_check_branch
          %468 = sbr.rel (%p466) target = $region20
        $region19: #{text_encoder_forward.1} parent=11 // pred_region
          _
        $region20: #{text_encoder_forward.1} parent=11 // pred_fallthru
          _
      $region12: #{text_encoder_forward.1} parent=5 // pred_fallthru
        _
      %p469 = scmp.lt.s32.totalorder %s30, 4
      // Predicated region
      $region21: #{text_encoder_forward.1} parent=5 // pred_check
        %p470 = pneg %p469
      $region22: #{text_encoder_forward.1} parent=5 // pred_check_branch
        %472 = sbr.rel (%p470) target = $region24
      $region23: #{text_encoder_forward.1} parent=5 // pred_region
        // Predicated region
        $region25: #{text_encoder_forward.1} parent=23 // pred_check
          %p473 = pneg %p62
        $region26: #{text_encoder_forward.1} parent=23 // pred_check_branch
          %475 = sbr.rel (%p473) target = $region28
        $region27: #{text_encoder_forward.1} parent=23 // pred_region
          %p476 = scmp.lt.s32.totalorder %s37, 1
          %s477 = scalar_select %p476, %s37, 1
          %s478 = smul.addr %s477, 8
          %s479 = scalar_lea.vmem %s0, %s478
        $region28: #{text_encoder_forward.1} parent=23 // pred_fallthru
          _
        // Predicated region
        $region29: #{text_encoder_forward.1} parent=23 // pred_check
          %p480 = pneg %p88
        $region30: #{text_encoder_forward.1} parent=23 // pred_check_branch
          %482 = sbr.rel (%p480) target = $region32
        $region31: #{text_encoder_forward.1} parent=23 // pred_region
          %p483 = scmp.lt.s32.totalorder %s38, 1
          %s484 = scalar_select %p483, %s38, 1
          %s485 = scalar_lea.vmem %s1, %s484
        $region32: #{text_encoder_forward.1} parent=23 // pred_fallthru
          _
        // Predicated region
        $region33: #{text_encoder_forward.1} parent=23 // pred_check
          %p486 = pneg %p114
        $region34: #{text_encoder_forward.1} parent=23 // pred_check_branch
          %488 = sbr.rel (%p486) target = $region36
        $region35: #{text_encoder_forward.1} parent=23 // pred_region
          %p489 = scmp.lt.s32.totalorder %s38, 1
          %s490 = scalar_select %p489, %s38, 1
          %s491 = scalar_lea.vmem %s2, %s490
        $region36: #{text_encoder_forward.1} parent=23 // pred_fallthru
          _
        // Predicated region
        $region37: #{text_encoder_forward.1} parent=23 // pred_check
          %p492 = pneg %p140
        $region38: #{text_encoder_forward.1} parent=23 // pred_check_branch
          %494 = sbr.rel (%p492) target = $region40
        $region39: #{text_encoder_forward.1} parent=23 // pred_region
          %s495 = sand.u32 %s130, 1
          %s496 = scalar_lea.sflag [#allocation4], %s495
          %s497 = sand.u32 %s130, 1
          %s498 = smul.addr %s497, 192
          %s499 = scalar_lea.vmem [#allocation3], %s498
          %s501 = ssub.s32 3072, 3072
          %502 = vsyncadd %s496, %s501
          %s503 = smul.addr %s38, 48
          %s504 = smul.addr %s503, 64
          %s505 = scalar_lea.hbm %s3, %s504
          %s506 = sshll.u32 %s499, 4
          %s507 = int_to_ptr.vmem [resolvable:$true] %s506
          %512 = dma.hbm_to_vmem [thread:$0]  %s505, 3072, %s507, %s496, 192, 192, 12
        $region40: #{text_encoder_forward.1} parent=23 // pred_fallthru
          _
        // Predicated region
        $region41: #{text_encoder_forward.1} parent=23 // pred_check
          %p513 = pneg %p166
        $region42: #{text_encoder_forward.1} parent=23 // pred_check_branch
          %515 = sbr.rel (%p513) target = $region44
        $region43: #{text_encoder_forward.1} parent=23 // pred_region
          %p516 = scmp.lt.s32.totalorder %s38, 1
          %s517 = scalar_select %p516, %s38, 1
          %s518 = smul.addr %s517, 3
          %s519 = scalar_lea.vmem %s4, %s518
        $region44: #{text_encoder_forward.1} parent=23 // pred_fallthru
          _
        // Predicated region
        $region45: #{text_encoder_forward.1} parent=23 // pred_check
          %p520 = pneg %p192
        $region46: #{text_encoder_forward.1} parent=23 // pred_check_branch
          %522 = sbr.rel (%p520) target = $region48
        $region47: #{text_encoder_forward.1} parent=23 // pred_region
          %p523 = scmp.lt.s32.totalorder %s38, 1
          %s524 = scalar_select %p523, %s38, 1
          %s525 = smul.addr %s524, 16
          %s526 = smul.addr %s525, 4
          %s527 = scalar_lea.vmem %s5, %s526
        $region48: #{text_encoder_forward.1} parent=23 // pred_fallthru
          _
        // Predicated region
        $region49: #{text_encoder_forward.1} parent=23 // pred_check
          %p528 = pneg %p218
        $region50: #{text_encoder_forward.1} parent=23 // pred_check_branch
          %530 = sbr.rel (%p528) target = $region52
        $region51: #{text_encoder_forward.1} parent=23 // pred_region
          %p531 = scmp.lt.s32.totalorder %s38, 1
          %s532 = scalar_select %p531, %s38, 1
          %s533 = scalar_lea.vmem %s6, %s532
        $region52: #{text_encoder_forward.1} parent=23 // pred_fallthru
          _
        // Predicated region
        $region53: #{text_encoder_forward.1} parent=23 // pred_check
          %p534 = pneg %p244
        $region54: #{text_encoder_forward.1} parent=23 // pred_check_branch
          %536 = sbr.rel (%p534) target = $region56
        $region55: #{text_encoder_forward.1} parent=23 // pred_region
          %p537 = scmp.lt.s32.totalorder %s38, 1
          %s538 = scalar_select %p537, %s38, 1
          %s539 = scalar_lea.vmem %s7, %s538
        $region56: #{text_encoder_forward.1} parent=23 // pred_fallthru
          _
        // Predicated region
        $region57: #{text_encoder_forward.1} parent=23 // pred_check
          %p540 = pneg %p270
        $region58: #{text_encoder_forward.1} parent=23 // pred_check_branch
          %542 = sbr.rel (%p540) target = $region60
        $region59: #{text_encoder_forward.1} parent=23 // pred_region
          %p543 = scmp.lt.s32.totalorder %s38, 1
          %s544 = scalar_select %p543, %s38, 1
          %s545 = scalar_lea.vmem %s8, %s544
        $region60: #{text_encoder_forward.1} parent=23 // pred_fallthru
          _
        // Predicated region
        $region61: #{text_encoder_forward.1} parent=23 // pred_check
          %p546 = pneg %p296
        $region62: #{text_encoder_forward.1} parent=23 // pred_check_branch
          %548 = sbr.rel (%p546) target = $region64
        $region63: #{text_encoder_forward.1} parent=23 // pred_region
          %s549 = sand.u32 %s30, 1
          %s550 = scalar_lea.sflag [#allocation7], %s549
          %s551 = sand.u32 %s286, 1
          %s552 = smul.addr %s551, 256
          %s553 = scalar_lea.vmem [#allocation6], %s552
          %s555 = ssub.s32 4096, 4096
          %556 = vsyncadd %s550, %s555
          %s557 = smul.addr %s38, 64
          %s558 = smul.addr %s557, 64
          %s559 = scalar_lea.hbm %s9, %s558
          %s560 = sshll.u32 %s553, 4
          %s561 = int_to_ptr.vmem [resolvable:$true] %s560
          %566 = dma.hbm_to_vmem [thread:$0]  %s559, 4096, %s561, %s550, 256, 256, 16
        $region64: #{text_encoder_forward.1} parent=23 // pred_fallthru
          _
        // Predicated region
        $region65: #{text_encoder_forward.1} parent=23 // pred_check
          %p567 = pneg %p322
        $region66: #{text_encoder_forward.1} parent=23 // pred_check_branch
          %569 = sbr.rel (%p567) target = $region68
        $region67: #{text_encoder_forward.1} parent=23 // pred_region
          %p570 = scmp.lt.s32.totalorder %s38, 1
          %s571 = scalar_select %p570, %s38, 1
          %s572 = smul.addr %s571, 4
          %s573 = scalar_lea.vmem %s10, %s572
        $region68: #{text_encoder_forward.1} parent=23 // pred_fallthru
          _
        // Predicated region
        $region69: #{text_encoder_forward.1} parent=23 // pred_check
          %p574 = pneg %p348
        $region70: #{text_encoder_forward.1} parent=23 // pred_check_branch
          %576 = sbr.rel (%p574) target = $region72
        $region71: #{text_encoder_forward.1} parent=23 // pred_region
          %s577 = sand.u32 %s30, 1
          %s578 = scalar_lea.sflag [#allocation7], %s577
          %s579 = sand.u32 %s338, 1
          %s580 = smul.addr %s579, 256
          %s581 = scalar_lea.vmem [#allocation8], %s580
          %s583 = ssub.s32 4096, 4096
          %584 = vsyncadd %s578, %s583
          %s585 = smul.addr %s38, 64
          %s586 = smul.addr %s585, 64
          %s587 = scalar_lea.hbm %s11, %s586
          %s588 = sshll.u32 %s581, 4
          %s589 = int_to_ptr.vmem [resolvable:$true] %s588
          %594 = dma.hbm_to_vmem [thread:$0]  %s587, 4096, %s589, %s578, 64, 64, 4
        $region72: #{text_encoder_forward.1} parent=23 // pred_fallthru
          _
        // Predicated region
        $region73: #{text_encoder_forward.1} parent=23 // pred_check
          %p595 = pneg %p374
        $region74: #{text_encoder_forward.1} parent=23 // pred_check_branch
          %597 = sbr.rel (%p595) target = $region76
        $region75: #{text_encoder_forward.1} parent=23 // pred_region
          %p598 = scmp.lt.s32.totalorder %s38, 1
          %s599 = scalar_select %p598, %s38, 1
          %s600 = scalar_lea.vmem %s12, %s599
        $region76: #{text_encoder_forward.1} parent=23 // pred_fallthru
          _
      $region24: #{text_encoder_forward.1} parent=5 // pred_fallthru
        _
      %p601 = scmp.le.s32.totalorder 1, %s30
      %p602 = scmp.lt.s32.totalorder %s30, 5
      %p603 = pnand %p601, %p602
      %p604 = pneg %p603
      // Predicated region
      $region77: #{text_encoder_forward.1} parent=5 // pred_check
        _
      $region78: #{text_encoder_forward.1} parent=5 // pred_check_branch
        %606 = sbr.rel (%p603) target = $region80
      $region79: #{text_encoder_forward.1} parent=5 // pred_region
        %s607 = ssub.s32 %s30, 1
        %s608 = sand.u32 %s133, 1
        %s609 = scalar_lea.sflag [#allocation4], %s608
        %s610 = sand.u32 %s133, 1
        %s611 = smul.addr %s610, 192
        %s612 = scalar_lea.vmem [#allocation3], %s611
        // Predicated region
        $region81: #{text_encoder_forward.1} parent=79 // pred_check
          %p613 = pneg %p146
        $region82: #{text_encoder_forward.1} parent=79 // pred_check_branch
          %615 = sbr.rel (%p613) target = $region84
        $region83: #{text_encoder_forward.1} parent=79 // pred_region
          %616 = dma.done %s609, 3072
        $region84: #{text_encoder_forward.1} parent=79 // pred_fallthru
          _
        %s617 = sand.u32 %s35, 1
        %s618 = scalar_lea.sflag [#allocation7], %s617
        %s619 = sand.u32 %s289, 1
        %s620 = smul.addr %s619, 256
        %s621 = scalar_lea.vmem [#allocation6], %s620
        // Predicated region
        $region85: #{text_encoder_forward.1} parent=79 // pred_check
          %p622 = pneg %p302
        $region86: #{text_encoder_forward.1} parent=79 // pred_check_branch
          %624 = sbr.rel (%p622) target = $region88
        $region87: #{text_encoder_forward.1} parent=79 // pred_region
          %625 = dma.done %s618, 4096
        $region88: #{text_encoder_forward.1} parent=79 // pred_fallthru
          _
        %s626 = sand.u32 %s35, 1
        %s627 = scalar_lea.sflag [#allocation7], %s626
        %s628 = sand.u32 %s341, 1
        %s629 = smul.addr %s628, 256
        %s630 = scalar_lea.vmem [#allocation8], %s629
        // Predicated region
        $region89: #{text_encoder_forward.1} parent=79 // pred_check
          %p631 = pneg %p354
        $region90: #{text_encoder_forward.1} parent=79 // pred_check_branch
          %633 = sbr.rel (%p631) target = $region92
        $region91: #{text_encoder_forward.1} parent=79 // pred_region
          %634 = dma.done %s627, 4096
        $region92: #{text_encoder_forward.1} parent=79 // pred_fallthru
          _
        %p635 = scmp.lt.s32.totalorder %s39, 1
        %s636 = scalar_select %p635, %s39, 1
        %s637 = smul.addr %s636, 8
        %s638 = scalar_lea.vmem %s0, %s637
        %p639 = pneg %p68
        %p640 = pneg %p65
        %p641 = scmp.lt.s32.totalorder %s40, 1
        %s642 = scalar_select %p641, %s40, 1
        %s643 = scalar_lea.vmem %s1, %s642
        %p644 = pneg %p94
        %p645 = pneg %p91
        %p646 = scmp.lt.s32.totalorder %s40, 1
        %s647 = scalar_select %p646, %s40, 1
        %s648 = scalar_lea.vmem %s2, %s647
        %p649 = pneg %p120
        %p650 = pneg %p117
        %s651 = sand.u32 %s133, 1
        %s652 = scalar_lea.sflag [#allocation4], %s651
        %s653 = sand.u32 %s133, 1
        %s654 = smul.addr %s653, 192
        %s655 = scalar_lea.vmem [#allocation3], %s654
        %p656 = pneg %p146
        %p657 = pneg %p143
        %p658 = scmp.lt.s32.totalorder %s40, 1
        %s659 = scalar_select %p658, %s40, 1
        %s660 = smul.addr %s659, 3
        %s661 = scalar_lea.vmem %s4, %s660
        %p662 = pneg %p172
        %p663 = pneg %p169
        %p664 = scmp.lt.s32.totalorder %s40, 1
        %s665 = scalar_select %p664, %s40, 1
        %s666 = smul.addr %s665, 16
        %s667 = smul.addr %s666, 4
        %s668 = scalar_lea.vmem %s5, %s667
        %p669 = pneg %p198
        %p670 = pneg %p195
        %p671 = scmp.lt.s32.totalorder %s40, 1
        %s672 = scalar_select %p671, %s40, 1
        %s673 = scalar_lea.vmem %s6, %s672
        %p674 = pneg %p224
        %p675 = pneg %p221
        %p676 = scmp.lt.s32.totalorder %s40, 1
        %s677 = scalar_select %p676, %s40, 1
        %s678 = scalar_lea.vmem %s7, %s677
        %p679 = pneg %p250
        %p680 = pneg %p247
        %p681 = scmp.lt.s32.totalorder %s40, 1
        %s682 = scalar_select %p681, %s40, 1
        %s683 = scalar_lea.vmem %s8, %s682
        %p684 = pneg %p276
        %p685 = pneg %p273
        %s686 = sand.u32 %s35, 1
        %s687 = scalar_lea.sflag [#allocation7], %s686
        %s688 = sand.u32 %s289, 1
        %s689 = smul.addr %s688, 256
        %s690 = scalar_lea.vmem [#allocation6], %s689
        %p691 = pneg %p302
        %p692 = pneg %p299
        %p693 = scmp.lt.s32.totalorder %s40, 1
        %s694 = scalar_select %p693, %s40, 1
        %s695 = smul.addr %s694, 4
        %s696 = scalar_lea.vmem %s10, %s695
        %p697 = pneg %p328
        %p698 = pneg %p325
        %s699 = sand.u32 %s35, 1
        %s700 = scalar_lea.sflag [#allocation7], %s699
        %s701 = sand.u32 %s341, 1
        %s702 = smul.addr %s701, 256
        %s703 = scalar_lea.vmem [#allocation8], %s702
        %p704 = pneg %p354
        %p705 = pneg %p351
        %p706 = scmp.lt.s32.totalorder %s40, 1
        %s707 = scalar_select %p706, %s40, 1
        %s708 = scalar_lea.vmem %s12, %s707
        %p709 = pneg %p380
        %p710 = pneg %p377
        %p711 = pneg %p401
        %p712 = pneg %p398
        %p713 = pneg %p422
        %p714 = pneg %p419
        %p715 = pneg %p448
        %p716 = pneg %p445
        %s717 = sand.u32 %s435, 1
        %s718 = scalar_lea.sflag [#allocation5], %s717
        %s719 = sand.u32 %s435, 1
        %s720 = smul.addr %s719, 8
        %s721 = scalar_lea.vmem [#allocation9], %s720
        %p722 = scmp.lt.s32.totalorder %s39, 1
        %s723 = scalar_select %p722, %s39, 1
        %s724 = smul.addr %s723, 8
        %s725 = scalar_lea.vmem %s0, %s724
        %p726 = scmp.lt.s32.totalorder %s40, 1
        %s727 = scalar_select %p726, %s40, 1
        %s728 = scalar_lea.vmem %s1, %s727
        %p729 = scmp.lt.s32.totalorder %s40, 1
        %s730 = scalar_select %p729, %s40, 1
        %s731 = scalar_lea.vmem %s2, %s730
        %p732 = scmp.lt.s32.totalorder %s40, 1
        %s733 = scalar_select %p732, %s40, 1
        %s734 = smul.addr %s733, 3
        %s735 = scalar_lea.vmem %s4, %s734
        %p736 = scmp.lt.s32.totalorder %s40, 1
        %s737 = scalar_select %p736, %s40, 1
        %s738 = smul.addr %s737, 16
        %s739 = smul.addr %s738, 4
        %s740 = scalar_lea.vmem %s5, %s739
        %p741 = scmp.lt.s32.totalorder %s40, 1
        %s742 = scalar_select %p741, %s40, 1
        %s743 = scalar_lea.vmem %s6, %s742
        %p744 = scmp.lt.s32.totalorder %s40, 1
        %s745 = scalar_select %p744, %s40, 1
        %s746 = scalar_lea.vmem %s7, %s745
        %p747 = scmp.lt.s32.totalorder %s40, 1
        %s748 = scalar_select %p747, %s40, 1
        %s749 = scalar_lea.vmem %s8, %s748
        %p750 = scmp.lt.s32.totalorder %s40, 1
        %s751 = scalar_select %p750, %s40, 1
        %s752 = smul.addr %s751, 4
        %s753 = scalar_lea.vmem %s10, %s752
        %p754 = scmp.lt.s32.totalorder %s40, 1
        %s755 = scalar_select %p754, %s40, 1
        %s756 = scalar_lea.vmem %s12, %s755
        %p758 = scmp.eq.s32.totalorder %s40, 0
        // Predicated region
        $region93: #{text_encoder_forward.1} parent=79 // pred_check
          %p759 = pneg %p758
        $region94: #{text_encoder_forward.1} parent=79 // pred_check_branch
          %761 = sbr.rel (%p759) target = $region96
        $region95: #{text_encoder_forward.1} parent=79 // pred_region
          %v762 = vld [vmem:[%s725] sm:$0xff]
          %763 = vst [vmem:[%s721] sm:$0xff] %v762
        $region96: #{text_encoder_forward.1} parent=79 // pred_fallthru
          _
        %v764 = vld [vmem:[%s721] sm:$0xff]
        %v765 = vlaneseq
        %v766 = vshrl.u32 %v765, 7
        %v767 = vlaneseq
        %v768 = vand.u32 %v767, 127
        %vm769 = vcmp.le.s32.totalorder %v768, %v766
        %v770 = vsel %vm769, 0.0, -1e+09
        %v771 = vld [vmem:[%s728] sm:$0x1]
        %v772 = vld [vmem:[%s731] sm:$0x1]
        %773 = vadd.xlane.f32.xlu0 %v764
        %v774 = vpop.xlane.xlu0 %773
        %v775 = vrcp.pop 128.0
        %v776 = vmul.f32 %v774, %v775
        %v777 = vmul.f32 %v764, %v764
        %778 = vadd.xlane.f32.xlu0 %v777
        %v779 = vpop.xlane.xlu0 %778
        %v780 = vmul.f32 %v779, %v775
        %v781 = vmul.f32 %v776, %v776
        %v782 = vsub.f32 %v780, %v781
        %v783 = vsub.f32 %v764, %v776
        %v784 = vadd.f32 %v782, 1e-05
        %v785 = vrsqrt.pop %v784
        %v786 = vmul.f32 %v783, %v785
        %v788 = vlaneseq
        %v789 = vshrl.u32 %v788, 7
        %v790 = vsub.s32 0, %v789
        %v791 = vrot.slane %v771, %v790
        %v793 = vmul.f32 %v786, %v791
        %v795 = vlaneseq
        %v796 = vshrl.u32 %v795, 7
        %v797 = vsub.s32 0, %v796
        %v798 = vrot.slane %v772, %v797
        %v800 = vadd.f32 %v793, %v798
        %v801 = vpack.c.bf16 %v800, %v800
        %v802 = vld [vmem:[%s612] sm:$0xff]
        %v803 = vld [vmem:[%s612 + $0x8] sm:$0xf]
        %v804 = vld [vmem:[%s612 + $0xc] sm:$0xff]
        %v805 = vld [vmem:[%s612 + $0x14] sm:$0xf]
        %v806 = vld [vmem:[%s612 + $0x18] sm:$0xff]
        %v807 = vld [vmem:[%s612 + $0x20] sm:$0xf]
        %v808 = vld [vmem:[%s612 + $0x24] sm:$0xff]
        %v809 = vld [vmem:[%s612 + $0x2c] sm:$0xf]
        %v810 = vld [vmem:[%s612 + $0x30] sm:$0xff]
        %v811 = vld [vmem:[%s612 + $0x38] sm:$0xf]
        %v812 = vld [vmem:[%s612 + $0x3c] sm:$0xff]
        %v813 = vld [vmem:[%s612 + $0x44] sm:$0xf]
        %v814 = vld [vmem:[%s612 + $0x48] sm:$0xff]
        %v815 = vld [vmem:[%s612 + $0x50] sm:$0xf]
        %v816 = vld [vmem:[%s612 + $0x54] sm:$0xff]
        %v817 = vld [vmem:[%s612 + $0x5c] sm:$0xf]
        %v818 = vld [vmem:[%s612 + $0x60] sm:$0xff]
        %v819 = vld [vmem:[%s612 + $0x68] sm:$0xf]
        %v820 = vld [vmem:[%s612 + $0x6c] sm:$0xff]
        %v821 = vld [vmem:[%s612 + $0x74] sm:$0xf]
        %v822 = vld [vmem:[%s612 + $0x78] sm:$0xff]
        %v823 = vld [vmem:[%s612 + $0x80] sm:$0xf]
        %v824 = vld [vmem:[%s612 + $0x84] sm:$0xff]
        %v825 = vld [vmem:[%s612 + $0x8c] sm:$0xf]
        %v826 = vld [vmem:[%s612 + $0x90] sm:$0xff]
        %v827 = vld [vmem:[%s612 + $0x98] sm:$0xf]
        %v828 = vld [vmem:[%s612 + $0x9c] sm:$0xff]
        %v829 = vld [vmem:[%s612 + $0xa4] sm:$0xf]
        %v830 = vld [vmem:[%s612 + $0xa8] sm:$0xff]
        %v831 = vld [vmem:[%s612 + $0xb0] sm:$0xf]
        %v832 = vld [vmem:[%s612 + $0xb4] sm:$0xff]
        %v833 = vld [vmem:[%s612 + $0xbc] sm:$0xf]
        %v834 = vld [vmem:[%s735] sm:$0x7]
        %v836 = vlaneseq
        %v837 = vshrl.u32 %v836, 7
        %v838 = vsub.s32 0, %v837
        %v839 = vrot.slane %v834, %v838
        %v840 = vlaneseq
        %v841 = vshrl.u32 %v840, 7
        %v842 = vsub.s32 1, %v841
        %v843 = vrot.slane %v834, %v842
        %v844 = vlaneseq
        %v845 = vshrl.u32 %v844, 7
        %v846 = vsub.s32 2, %v845
        %v847 = vrot.slane %v834, %v846
        %v883 = vunpack.c.l.b16 %v802
        %v884 = vunpack.c.h.b16 %v802
        %v885 = vunpack.c.l.b16 %v803
        %v886 = vunpack.c.l.b16 %v804
        %v887 = vunpack.c.h.b16 %v804
        %v888 = vunpack.c.l.b16 %v805
        %v889 = vunpack.c.l.b16 %v806
        %v890 = vunpack.c.h.b16 %v806
        %v891 = vunpack.c.l.b16 %v807
        %v892 = vunpack.c.l.b16 %v808
        %v893 = vunpack.c.h.b16 %v808
        %v894 = vunpack.c.l.b16 %v809
        %v895 = vunpack.c.l.b16 %v810
        %v896 = vunpack.c.h.b16 %v810
        %v897 = vunpack.c.l.b16 %v811
        %v898 = vunpack.c.l.b16 %v812
        %v899 = vunpack.c.h.b16 %v812
        %v900 = vunpack.c.l.b16 %v813
        %v901 = vunpack.c.l.b16 %v814
        %v902 = vunpack.c.h.b16 %v814
        %v903 = vunpack.c.l.b16 %v815
        %v904 = vunpack.c.l.b16 %v816
        %v905 = vunpack.c.h.b16 %v816
        %v906 = vunpack.c.l.b16 %v817
        %v907 = vunpack.c.l.b16 %v818
        %v908 = vunpack.c.h.b16 %v818
        %v909 = vunpack.c.l.b16 %v819
        %v910 = vunpack.c.l.b16 %v820
        %v911 = vunpack.c.h.b16 %v820
        %v912 = vunpack.c.l.b16 %v821
        %v913 = vunpack.c.l.b16 %v822
        %v914 = vunpack.c.h.b16 %v822
        %v915 = vunpack.c.l.b16 %v823
        %v916 = vunpack.c.l.b16 %v824
        %v917 = vunpack.c.h.b16 %v824
        %v918 = vunpack.c.l.b16 %v825
        %v919 = vunpack.c.l.b16 %v826
        %v920 = vunpack.c.h.b16 %v826
        %v921 = vunpack.c.l.b16 %v827
        %v922 = vunpack.c.l.b16 %v828
        %v923 = vunpack.c.h.b16 %v828
        %v924 = vunpack.c.l.b16 %v829
        %v925 = vunpack.c.l.b16 %v830
        %v926 = vunpack.c.h.b16 %v830
        %v927 = vunpack.c.l.b16 %v831
        %v928 = vunpack.c.l.b16 %v832
        %v929 = vunpack.c.h.b16 %v832
        %v930 = vunpack.c.l.b16 %v833
        %v931 = vpack.c.b16 %v886, %v883
        %v932 = vpack.c.b16 %v887, %v884
        %v933 = vpack.c.b16 %v888, %v885
        %v934 = vpack.c.b16 %v892, %v889
        %v935 = vpack.c.b16 %v893, %v890
        %v936 = vpack.c.b16 %v894, %v891
        %v937 = vpack.c.b16 %v898, %v895
        %v938 = vpack.c.b16 %v899, %v896
        %v939 = vpack.c.b16 %v900, %v897
        %v940 = vpack.c.b16 %v904, %v901
        %v941 = vpack.c.b16 %v905, %v902
        %v942 = vpack.c.b16 %v906, %v903
        %v943 = vpack.c.b16 %v910, %v907
        %v944 = vpack.c.b16 %v911, %v908
        %v945 = vpack.c.b16 %v912, %v909
        %v946 = vpack.c.b16 %v916, %v913
        %v947 = vpack.c.b16 %v917, %v914
        %v948 = vpack.c.b16 %v918, %v915
        %v949 = vpack.c.b16 %v922, %v919
        %v950 = vpack.c.b16 %v923, %v920
        %v951 = vpack.c.b16 %v924, %v921
        %v952 = vpack.c.b16 %v928, %v925
        %v953 = vpack.c.b16 %v929, %v926
        %v954 = vpack.c.b16 %v930, %v927
        %979 = vmatprep.subr.bf16.mxu0 %v932
        %980 = vmatpush1.bf16.msra.mxu0 %v931
        %981 = vmatprep.subr.bf16.mxu0 %v935
        %982 = vmatpush1.bf16.msra.mxu0 %v934
        %983 = vmatprep.subr.bf16.mxu0 %v938
        %984 = vmatpush1.bf16.msra.mxu0 %v937
        %985 = vmatprep.subr.bf16.mxu0 %v941
        %986 = vmatpush1.bf16.msra.mxu0 %v940
        %987 = vmatprep.subr.bf16.mxu0 %v944
        %988 = vmatpush1.bf16.msra.mxu0 %v943
        %989 = vmatprep.subr.bf16.mxu0 %v947
        %990 = vmatpush1.bf16.msra.mxu0 %v946
        %991 = vmatprep.subr.bf16.mxu0 %v950
        %992 = vmatpush1.bf16.msra.mxu0 %v949
        %993 = vmatprep.subr.bf16.mxu0 %v953
        %994 = vmatpush1.bf16.msra.mxu0 %v952
        %995 = vmatprep.subr.bf16.mxu0 0
        %996 = vmatpush1.bf16.msra.mxu0 0
        %997 = vmatprep.subr.bf16.mxu0 0
        %998 = vmatpush1.bf16.msra.mxu0 0
        %999 = vmatprep.subr.bf16.mxu0 0
        %1000 = vmatpush1.bf16.msra.mxu0 0
        %1001 = vmatprep.subr.bf16.mxu0 0
        %1002 = vmatpush1.bf16.msra.mxu0 0
        %1003 = vmatprep.subr.bf16.mxu0 0
        %1004 = vmatpush1.bf16.msra.mxu0 0
        %1005 = vmatprep.subr.bf16.mxu0 0
        %1006 = vmatpush1.bf16.msra.mxu0 0
        %1007 = vmatprep.subr.bf16.mxu0 0
        %1008 = vmatpush1.bf16.msra.mxu0 0
        %1009 = vmatprep.subr.bf16.mxu0 0
        %1010 = vmatpush1.bf16.msra.mxu0 0
        %1011 = vmatprep.mubr.bf16.mxu0 0
        %1012 = vmatmul.mubr.bf16.gmra.mrb[0].mxu0 %v801
        %v1013 = vpop.f32.mrb[0].mxu0
        %v1014 = vadd.f32 %v839, %v1013
        %v1015 = vpop.f32.mrb[0].mxu0
        %v1016 = vadd.f32 %v843, %v1015
        %v1017 = vpop.f32.mrb[0].mxu0
        %v1018 = vpop.f32.mrb[0].mxu0
        %1019 = vdwg.mxu0
        %1020 = vmatprep.subr.bf16.mxu0 0
        %1021 = vmatpush1.bf16.msra.mxu0 %v933
        %1022 = vmatprep.subr.bf16.mxu0 0
        %1023 = vmatpush1.bf16.msra.mxu0 %v936
        %1024 = vmatprep.subr.bf16.mxu0 0
        %1025 = vmatpush1.bf16.msra.mxu0 %v939
        %1026 = vmatprep.subr.bf16.mxu0 0
        %1027 = vmatpush1.bf16.msra.mxu0 %v942
        %1028 = vmatprep.subr.bf16.mxu0 0
        %1029 = vmatpush1.bf16.msra.mxu0 %v945
        %1030 = vmatprep.subr.bf16.mxu0 0
        %1031 = vmatpush1.bf16.msra.mxu0 %v948
        %1032 = vmatprep.subr.bf16.mxu0 0
        %1033 = vmatpush1.bf16.msra.mxu0 %v951
        %1034 = vmatprep.subr.bf16.mxu0 0
        %1035 = vmatpush1.bf16.msra.mxu0 %v954
        %1036 = vmatprep.subr.bf16.mxu0 0
        %1037 = vmatpush1.bf16.msra.mxu0 0
        %1038 = vmatprep.subr.bf16.mxu0 0
        %1039 = vmatpush1.bf16.msra.mxu0 0
        %1040 = vmatprep.subr.bf16.mxu0 0
        %1041 = vmatpush1.bf16.msra.mxu0 0
        %1042 = vmatprep.subr.bf16.mxu0 0
        %1043 = vmatpush1.bf16.msra.mxu0 0
        %1044 = vmatprep.subr.bf16.mxu0 0
        %1045 = vmatpush1.bf16.msra.mxu0 0
        %1046 = vmatprep.subr.bf16.mxu0 0
        %1047 = vmatpush1.bf16.msra.mxu0 0
        %1048 = vmatprep.subr.bf16.mxu0 0
        %1049 = vmatpush1.bf16.msra.mxu0 0
        %1050 = vmatprep.subr.bf16.mxu0 0
        %1051 = vmatpush1.bf16.msra.mxu0 0
        %1052 = vmatprep.mubr.bf16.mxu0 0
        %1053 = vmatmul.mubr.bf16.gmra.mrb[0].mxu0 %v801
        %v1054 = vpop.f32.mrb[0].mxu0
        %v1055 = vadd.f32 %v847, %v1054
        %v1056 = vpop.f32.mrb[0].mxu0
        %v1057 = vpop.f32.mrb[0].mxu0
        %v1058 = vpop.f32.mrb[0].mxu0
        %1059 = vdwg.mxu0
        %v1060 = vmul.f32 %v1014, 0.17677669
        %vm1061 = vcmask 261120
        %v1063 = vsel %vm1061, %v1060, 0
        %v1066 = vsel %vm1061, %v1016, 0
        %1068 = vmatprep.subr.mxu0 0.0
        %1069 = vmatpush1.xpose.msra.mxu0 %v1066
        %1070 = vmatprep.subr.mxu0 0.0
        %1071 = vmatpush1.xpose.msra.mxu0 0.0
        %1072 = vmatprep.subr.mxu0 0.0
        %1073 = vmatpush1.xpose.msra.mxu0 0.0
        %1074 = vmatprep.subr.mxu0 0.0
        %1075 = vmatpush1.xpose.msra.mxu0 0.0
        %1076 = vmatprep.subr.mxu0 0.0
        %1077 = vmatpush1.xpose.msra.mxu0 0.0
        %1078 = vmatprep.subr.mxu0 0.0
        %1079 = vmatpush1.xpose.msra.mxu0 0.0
        %1080 = vmatprep.subr.mxu0 0.0
        %1081 = vmatpush1.xpose.msra.mxu0 0.0
        %1082 = vmatprep.subr.mxu0 0.0
        %1083 = vmatpush1.xpose.msra.mxu0 0.0
        %1084 = vmatprep.subr.mxu0 0.0
        %1085 = vmatpush1.xpose.msra.mxu0 0.0
        %1086 = vmatprep.subr.mxu0 0.0
        %1087 = vmatpush1.xpose.msra.mxu0 0.0
        %1088 = vmatprep.subr.mxu0 0.0
        %1089 = vmatpush1.xpose.msra.mxu0 0.0
        %1090 = vmatprep.subr.mxu0 0.0
        %1091 = vmatpush1.xpose.msra.mxu0 0.0
        %1092 = vmatprep.subr.mxu0 0.0
        %1093 = vmatpush1.xpose.msra.mxu0 0.0
        %1094 = vmatprep.subr.mxu0 0.0
        %1095 = vmatpush1.xpose.msra.mxu0 0.0
        %1096 = vmatprep.subr.mxu0 0.0
        %1097 = vmatpush1.xpose.msra.mxu0 0.0
        %1098 = vmatprep.subr.mxu0 0.0
        %1099 = vmatpush1.xpose.msra.mxu0 0.0
        %1100 = vmatprep.subr.mxu0 0.0
        %1101 = vmatpush1.xpose.msra.mxu0 0.0
        %1102 = vmatprep.subr.mxu0 0.0
        %1103 = vmatpush1.xpose.msra.mxu0 0.0
        %1104 = vmatprep.subr.mxu0 0.0
        %1105 = vmatpush1.xpose.msra.mxu0 0.0
        %1106 = vmatprep.subr.mxu0 0.0
        %1107 = vmatpush1.xpose.msra.mxu0 0.0
        %1108 = vmatprep.subr.mxu0 0.0
        %1109 = vmatpush1.xpose.msra.mxu0 0.0
        %1110 = vmatprep.subr.mxu0 0.0
        %1111 = vmatpush1.xpose.msra.mxu0 0.0
        %1112 = vmatprep.subr.mxu0 0.0
        %1113 = vmatpush1.xpose.msra.mxu0 0.0
        %1114 = vmatprep.subr.mxu0 0.0
        %1115 = vmatpush1.xpose.msra.mxu0 0.0
        %1116 = vmatprep.subr.mxu0 0.0
        %1117 = vmatpush1.xpose.msra.mxu0 0.0
        %1118 = vmatprep.subr.mxu0 0.0
        %1119 = vmatpush1.xpose.msra.mxu0 0.0
        %1120 = vmatprep.subr.mxu0 0.0
        %1121 = vmatpush1.xpose.msra.mxu0 0.0
        %1122 = vmatprep.subr.mxu0 0.0
        %1123 = vmatpush1.xpose.msra.mxu0 0.0
        %1124 = vmatprep.subr.mxu0 0.0
        %1125 = vmatpush1.xpose.msra.mxu0 0.0
        %1126 = vmatprep.subr.mxu0 0.0
        %1127 = vmatpush1.xpose.msra.mxu0 0.0
        %1128 = vmatprep.subr.mxu0 0.0
        %1129 = vmatpush1.xpose.msra.mxu0 0.0
        %1130 = vmatprep.subr.mxu0 0.0
        %1131 = vmatpush1.xpose.msra.mxu0 0.0
        %1132 = vmatprep.mubr.f32.mxu0 0.0
        %1133 = vmatmul.mubr.f32.gmra.mrb[0].mxu0 %v1063
        %v1134 = vpop.f32.mrb[0].mxu0
        %v1135 = vadd.f32 %v770, %v1134
        %v1136 = vpop.f32.mrb[0].mxu0
        %1137 = vdwg.mxu0
        %vm1138 = vcmask 64512
        %v1139 = vsel %vm1138, %v1135, -inf
        %1140 = vmax.xlane.f32.xlu0 %v1139
        %v1141 = vpop.xlane.xlu0 %1140
        %v1142 = vsub.f32 %v1135, %v1141
        %v1143 = vmul.f32 %v1142, 1.442695
        %v1144 = vpow.pop %v1143
        %v1145 = vsel %vm1138, %v1144, 0.0
        %1146 = vadd.xlane.f32.xlu0 %v1145
        %v1147 = vpop.xlane.xlu0 %1146
        %v1148 = vrcp.pop %v1147
        %v1149 = vmul.f32 %v1144, %v1148
        %v1151 = vsel %vm1138, %v1149, 0
        %1153 = vmatprep.subr.mxu0 0.0
        %1154 = vmatpush1.msra.mxu0 %v1055
        %1155 = vmatprep.subr.mxu0 0.0
        %1156 = vmatpush1.msra.mxu0 0.0
        %1157 = vmatprep.subr.mxu0 0.0
        %1158 = vmatpush1.msra.mxu0 0.0
        %1159 = vmatprep.subr.mxu0 0.0
        %1160 = vmatpush1.msra.mxu0 0.0
        %1161 = vmatprep.subr.mxu0 0.0
        %1162 = vmatpush1.msra.mxu0 0.0
        %1163 = vmatprep.subr.mxu0 0.0
        %1164 = vmatpush1.msra.mxu0 0.0
        %1165 = vmatprep.subr.mxu0 0.0
        %1166 = vmatpush1.msra.mxu0 0.0
        %1167 = vmatprep.subr.mxu0 0.0
        %1168 = vmatpush1.msra.mxu0 0.0
        %1169 = vmatprep.subr.mxu0 0.0
        %1170 = vmatpush1.msra.mxu0 0.0
        %1171 = vmatprep.subr.mxu0 0.0
        %1172 = vmatpush1.msra.mxu0 0.0
        %1173 = vmatprep.subr.mxu0 0.0
        %1174 = vmatpush1.msra.mxu0 0.0
        %1175 = vmatprep.subr.mxu0 0.0
        %1176 = vmatpush1.msra.mxu0 0.0
        %1177 = vmatprep.subr.mxu0 0.0
        %1178 = vmatpush1.msra.mxu0 0.0
        %1179 = vmatprep.subr.mxu0 0.0
        %1180 = vmatpush1.msra.mxu0 0.0
        %1181 = vmatprep.subr.mxu0 0.0
        %1182 = vmatpush1.msra.mxu0 0.0
        %1183 = vmatprep.subr.mxu0 0.0
        %1184 = vmatpush1.msra.mxu0 0.0
        %1185 = vmatprep.subr.mxu0 0.0
        %1186 = vmatpush1.msra.mxu0 0.0
        %1187 = vmatprep.subr.mxu0 0.0
        %1188 = vmatpush1.msra.mxu0 0.0
        %1189 = vmatprep.subr.mxu0 0.0
        %1190 = vmatpush1.msra.mxu0 0.0
        %1191 = vmatprep.subr.mxu0 0.0
        %1192 = vmatpush1.msra.mxu0 0.0
        %1193 = vmatprep.subr.mxu0 0.0
        %1194 = vmatpush1.msra.mxu0 0.0
        %1195 = vmatprep.subr.mxu0 0.0
        %1196 = vmatpush1.msra.mxu0 0.0
        %1197 = vmatprep.subr.mxu0 0.0
        %1198 = vmatpush1.msra.mxu0 0.0
        %1199 = vmatprep.subr.mxu0 0.0
        %1200 = vmatpush1.msra.mxu0 0.0
        %1201 = vmatprep.subr.mxu0 0.0
        %1202 = vmatpush1.msra.mxu0 0.0
        %1203 = vmatprep.subr.mxu0 0.0
        %1204 = vmatpush1.msra.mxu0 0.0
        %1205 = vmatprep.subr.mxu0 0.0
        %1206 = vmatpush1.msra.mxu0 0.0
        %1207 = vmatprep.subr.mxu0 0.0
        %1208 = vmatpush1.msra.mxu0 0.0
        %1209 = vmatprep.subr.mxu0 0.0
        %1210 = vmatpush1.msra.mxu0 0.0
        %1211 = vmatprep.subr.mxu0 0.0
        %1212 = vmatpush1.msra.mxu0 0.0
        %1213 = vmatprep.subr.mxu0 0.0
        %1214 = vmatpush1.msra.mxu0 0.0
        %1215 = vmatprep.subr.mxu0 0.0
        %1216 = vmatpush1.msra.mxu0 0.0
        %1217 = vmatprep.mubr.f32.mxu0 0.0
        %1218 = vmatmul.mubr.f32.gmra.mrb[0].mxu0 %v1151
        %v1219 = vpop.f32.mrb[0].mxu0
        %v1220 = vadd.f32 0.0, %v1219
        %v1221 = vpop.f32.mrb[0].mxu0
        %1222 = vdwg.mxu0
        %1223 = vst.msk [vmem:[#allocation2] sm:$0xff] %vm1061, %v1220
        %1224 = vrot.lane.b32.xlu0 %v1060, 96
        %v1225 = vpop.permute.xlu0 %1224
        %1226 = vrot.lane.b32.xlu0 %v1016, 96
        %v1227 = vpop.permute.xlu0 %1226
        %v1228 = vsel %vm1061, %v1225, 0
        %v1230 = vsel %vm1061, %v1227, 0
        %1232 = vmatprep.subr.mxu0 0.0
        %1233 = vmatpush1.xpose.msra.mxu0 %v1230
        %1234 = vmatprep.subr.mxu0 0.0
        %1235 = vmatpush1.xpose.msra.mxu0 0.0
        %1236 = vmatprep.subr.mxu0 0.0
        %1237 = vmatpush1.xpose.msra.mxu0 0.0
        %1238 = vmatprep.subr.mxu0 0.0
        %1239 = vmatpush1.xpose.msra.mxu0 0.0
        %1240 = vmatprep.subr.mxu0 0.0
        %1241 = vmatpush1.xpose.msra.mxu0 0.0
        %1242 = vmatprep.subr.mxu0 0.0
        %1243 = vmatpush1.xpose.msra.mxu0 0.0
        %1244 = vmatprep.subr.mxu0 0.0
        %1245 = vmatpush1.xpose.msra.mxu0 0.0
        %1246 = vmatprep.subr.mxu0 0.0
        %1247 = vmatpush1.xpose.msra.mxu0 0.0
        %1248 = vmatprep.subr.mxu0 0.0
        %1249 = vmatpush1.xpose.msra.mxu0 0.0
        %1250 = vmatprep.subr.mxu0 0.0
        %1251 = vmatpush1.xpose.msra.mxu0 0.0
        %1252 = vmatprep.subr.mxu0 0.0
        %1253 = vmatpush1.xpose.msra.mxu0 0.0
        %1254 = vmatprep.subr.mxu0 0.0
        %1255 = vmatpush1.xpose.msra.mxu0 0.0
        %1256 = vmatprep.subr.mxu0 0.0
        %1257 = vmatpush1.xpose.msra.mxu0 0.0
        %1258 = vmatprep.subr.mxu0 0.0
        %1259 = vmatpush1.xpose.msra.mxu0 0.0
        %1260 = vmatprep.subr.mxu0 0.0
        %1261 = vmatpush1.xpose.msra.mxu0 0.0
        %1262 = vmatprep.subr.mxu0 0.0
        %1263 = vmatpush1.xpose.msra.mxu0 0.0
        %1264 = vmatprep.subr.mxu0 0.0
        %1265 = vmatpush1.xpose.msra.mxu0 0.0
        %1266 = vmatprep.subr.mxu0 0.0
        %1267 = vmatpush1.xpose.msra.mxu0 0.0
        %1268 = vmatprep.subr.mxu0 0.0
        %1269 = vmatpush1.xpose.msra.mxu0 0.0
        %1270 = vmatprep.subr.mxu0 0.0
        %1271 = vmatpush1.xpose.msra.mxu0 0.0
        %1272 = vmatprep.subr.mxu0 0.0
        %1273 = vmatpush1.xpose.msra.mxu0 0.0
        %1274 = vmatprep.subr.mxu0 0.0
        %1275 = vmatpush1.xpose.msra.mxu0 0.0
        %1276 = vmatprep.subr.mxu0 0.0
        %1277 = vmatpush1.xpose.msra.mxu0 0.0
        %1278 = vmatprep.subr.mxu0 0.0
        %1279 = vmatpush1.xpose.msra.mxu0 0.0
        %1280 = vmatprep.subr.mxu0 0.0
        %1281 = vmatpush1.xpose.msra.mxu0 0.0
        %1282 = vmatprep.subr.mxu0 0.0
        %1283 = vmatpush1.xpose.msra.mxu0 0.0
        %1284 = vmatprep.subr.mxu0 0.0
        %1285 = vmatpush1.xpose.msra.mxu0 0.0
        %1286 = vmatprep.subr.mxu0 0.0
        %1287 = vmatpush1.xpose.msra.mxu0 0.0
        %1288 = vmatprep.subr.mxu0 0.0
        %1289 = vmatpush1.xpose.msra.mxu0 0.0
        %1290 = vmatprep.subr.mxu0 0.0
        %1291 = vmatpush1.xpose.msra.mxu0 0.0
        %1292 = vmatprep.subr.mxu0 0.0
        %1293 = vmatpush1.xpose.msra.mxu0 0.0
        %1294 = vmatprep.subr.mxu0 0.0
        %1295 = vmatpush1.xpose.msra.mxu0 0.0
        %1296 = vmatprep.mubr.f32.mxu0 0.0
        %1297 = vmatmul.mubr.f32.gmra.mrb[0].mxu0 %v1228
        %v1298 = vpop.f32.mrb[0].mxu0
        %v1299 = vadd.f32 %v770, %v1298
        %v1300 = vpop.f32.mrb[0].mxu0
        %1301 = vdwg.mxu0
        %v1302 = vsel %vm1138, %v1299, -inf
        %1303 = vmax.xlane.f32.xlu0 %v1302
        %v1304 = vpop.xlane.xlu0 %1303
        %v1305 = vsub.f32 %v1299, %v1304
        %v1306 = vmul.f32 %v1305, 1.442695
        %v1307 = vpow.pop %v1306
        %v1308 = vsel %vm1138, %v1307, 0.0
        %1309 = vadd.xlane.f32.xlu0 %v1308
        %v1310 = vpop.xlane.xlu0 %1309
        %v1311 = vrcp.pop %v1310
        %v1312 = vmul.f32 %v1307, %v1311
        %1314 = vrot.lane.b32.xlu0 %v1055, 96
        %v1315 = vpop.permute.xlu0 %1314
        %v1318 = vsel %vm1138, %v1312, 0
        %1320 = vmatprep.subr.mxu0 0.0
        %1321 = vmatpush1.msra.mxu0 %v1315
        %1322 = vmatprep.subr.mxu0 0.0
        %1323 = vmatpush1.msra.mxu0 0.0
        %1324 = vmatprep.subr.mxu0 0.0
        %1325 = vmatpush1.msra.mxu0 0.0
        %1326 = vmatprep.subr.mxu0 0.0
        %1327 = vmatpush1.msra.mxu0 0.0
        %1328 = vmatprep.subr.mxu0 0.0
        %1329 = vmatpush1.msra.mxu0 0.0
        %1330 = vmatprep.subr.mxu0 0.0
        %1331 = vmatpush1.msra.mxu0 0.0
        %1332 = vmatprep.subr.mxu0 0.0
        %1333 = vmatpush1.msra.mxu0 0.0
        %1334 = vmatprep.subr.mxu0 0.0
        %1335 = vmatpush1.msra.mxu0 0.0
        %1336 = vmatprep.subr.mxu0 0.0
        %1337 = vmatpush1.msra.mxu0 0.0
        %1338 = vmatprep.subr.mxu0 0.0
        %1339 = vmatpush1.msra.mxu0 0.0
        %1340 = vmatprep.subr.mxu0 0.0
        %1341 = vmatpush1.msra.mxu0 0.0
        %1342 = vmatprep.subr.mxu0 0.0
        %1343 = vmatpush1.msra.mxu0 0.0
        %1344 = vmatprep.subr.mxu0 0.0
        %1345 = vmatpush1.msra.mxu0 0.0
        %1346 = vmatprep.subr.mxu0 0.0
        %1347 = vmatpush1.msra.mxu0 0.0
        %1348 = vmatprep.subr.mxu0 0.0
        %1349 = vmatpush1.msra.mxu0 0.0
        %1350 = vmatprep.subr.mxu0 0.0
        %1351 = vmatpush1.msra.mxu0 0.0
        %1352 = vmatprep.subr.mxu0 0.0
        %1353 = vmatpush1.msra.mxu0 0.0
        %1354 = vmatprep.subr.mxu0 0.0
        %1355 = vmatpush1.msra.mxu0 0.0
        %1356 = vmatprep.subr.mxu0 0.0
        %1357 = vmatpush1.msra.mxu0 0.0
        %1358 = vmatprep.subr.mxu0 0.0
        %1359 = vmatpush1.msra.mxu0 0.0
        %1360 = vmatprep.subr.mxu0 0.0
        %1361 = vmatpush1.msra.mxu0 0.0
        %1362 = vmatprep.subr.mxu0 0.0
        %1363 = vmatpush1.msra.mxu0 0.0
        %1364 = vmatprep.subr.mxu0 0.0
        %1365 = vmatpush1.msra.mxu0 0.0
        %1366 = vmatprep.subr.mxu0 0.0
        %1367 = vmatpush1.msra.mxu0 0.0
        %1368 = vmatprep.subr.mxu0 0.0
        %1369 = vmatpush1.msra.mxu0 0.0
        %1370 = vmatprep.subr.mxu0 0.0
        %1371 = vmatpush1.msra.mxu0 0.0
        %1372 = vmatprep.subr.mxu0 0.0
        %1373 = vmatpush1.msra.mxu0 0.0
        %1374 = vmatprep.subr.mxu0 0.0
        %1375 = vmatpush1.msra.mxu0 0.0
        %1376 = vmatprep.subr.mxu0 0.0
        %1377 = vmatpush1.msra.mxu0 0.0
        %1378 = vmatprep.subr.mxu0 0.0
        %1379 = vmatpush1.msra.mxu0 0.0
        %1380 = vmatprep.subr.mxu0 0.0
        %1381 = vmatpush1.msra.mxu0 0.0
        %1382 = vmatprep.subr.mxu0 0.0
        %1383 = vmatpush1.msra.mxu0 0.0
        %1384 = vmatprep.mubr.f32.mxu0 0.0
        %1385 = vmatmul.mubr.f32.gmra.mrb[0].mxu0 %v1318
        %v1386 = vpop.f32.mrb[0].mxu0
        %v1387 = vadd.f32 0.0, %v1386
        %v1388 = vpop.f32.mrb[0].mxu0
        %1389 = vdwg.mxu0
        %1391 = vrot.lane.b32.xlu0 %v1387, 32
        %v1392 = vpop.permute.xlu0 %1391
        %vm1394 = vcmask 523520
        %1395 = vst.msk [vmem:[#allocation2] sm:$0xff] %vm1394, %v1392
        %1396 = vrot.lane.b32.xlu0 %v1060, 64
        %v1397 = vpop.permute.xlu0 %1396
        %1398 = vrot.lane.b32.xlu0 %v1016, 64
        %v1399 = vpop.permute.xlu0 %1398
        %v1400 = vsel %vm1061, %v1397, 0
        %v1402 = vsel %vm1061, %v1399, 0
        %1404 = vmatprep.subr.mxu0 0.0
        %1405 = vmatpush1.xpose.msra.mxu0 %v1402
        %1406 = vmatprep.subr.mxu0 0.0
        %1407 = vmatpush1.xpose.msra.mxu0 0.0
        %1408 = vmatprep.subr.mxu0 0.0
        %1409 = vmatpush1.xpose.msra.mxu0 0.0
        %1410 = vmatprep.subr.mxu0 0.0
        %1411 = vmatpush1.xpose.msra.mxu0 0.0
        %1412 = vmatprep.subr.mxu0 0.0
        %1413 = vmatpush1.xpose.msra.mxu0 0.0
        %1414 = vmatprep.subr.mxu0 0.0
        %1415 = vmatpush1.xpose.msra.mxu0 0.0
        %1416 = vmatprep.subr.mxu0 0.0
        %1417 = vmatpush1.xpose.msra.mxu0 0.0
        %1418 = vmatprep.subr.mxu0 0.0
        %1419 = vmatpush1.xpose.msra.mxu0 0.0
        %1420 = vmatprep.subr.mxu0 0.0
        %1421 = vmatpush1.xpose.msra.mxu0 0.0
        %1422 = vmatprep.subr.mxu0 0.0
        %1423 = vmatpush1.xpose.msra.mxu0 0.0
        %1424 = vmatprep.subr.mxu0 0.0
        %1425 = vmatpush1.xpose.msra.mxu0 0.0
        %1426 = vmatprep.subr.mxu0 0.0
        %1427 = vmatpush1.xpose.msra.mxu0 0.0
        %1428 = vmatprep.subr.mxu0 0.0
        %1429 = vmatpush1.xpose.msra.mxu0 0.0
        %1430 = vmatprep.subr.mxu0 0.0
        %1431 = vmatpush1.xpose.msra.mxu0 0.0
        %1432 = vmatprep.subr.mxu0 0.0
        %1433 = vmatpush1.xpose.msra.mxu0 0.0
        %1434 = vmatprep.subr.mxu0 0.0
        %1435 = vmatpush1.xpose.msra.mxu0 0.0
        %1436 = vmatprep.subr.mxu0 0.0
        %1437 = vmatpush1.xpose.msra.mxu0 0.0
        %1438 = vmatprep.subr.mxu0 0.0
        %1439 = vmatpush1.xpose.msra.mxu0 0.0
        %1440 = vmatprep.subr.mxu0 0.0
        %1441 = vmatpush1.xpose.msra.mxu0 0.0
        %1442 = vmatprep.subr.mxu0 0.0
        %1443 = vmatpush1.xpose.msra.mxu0 0.0
        %1444 = vmatprep.subr.mxu0 0.0
        %1445 = vmatpush1.xpose.msra.mxu0 0.0
        %1446 = vmatprep.subr.mxu0 0.0
        %1447 = vmatpush1.xpose.msra.mxu0 0.0
        %1448 = vmatprep.subr.mxu0 0.0
        %1449 = vmatpush1.xpose.msra.mxu0 0.0
        %1450 = vmatprep.subr.mxu0 0.0
        %1451 = vmatpush1.xpose.msra.mxu0 0.0
        %1452 = vmatprep.subr.mxu0 0.0
        %1453 = vmatpush1.xpose.msra.mxu0 0.0
        %1454 = vmatprep.subr.mxu0 0.0
        %1455 = vmatpush1.xpose.msra.mxu0 0.0
        %1456 = vmatprep.subr.mxu0 0.0
        %1457 = vmatpush1.xpose.msra.mxu0 0.0
        %1458 = vmatprep.subr.mxu0 0.0
        %1459 = vmatpush1.xpose.msra.mxu0 0.0
        %1460 = vmatprep.subr.mxu0 0.0
        %1461 = vmatpush1.xpose.msra.mxu0 0.0
        %1462 = vmatprep.subr.mxu0 0.0
        %1463 = vmatpush1.xpose.msra.mxu0 0.0
        %1464 = vmatprep.subr.mxu0 0.0
        %1465 = vmatpush1.xpose.msra.mxu0 0.0
        %1466 = vmatprep.subr.mxu0 0.0
        %1467 = vmatpush1.xpose.msra.mxu0 0.0
        %1468 = vmatprep.mubr.f32.mxu0 0.0
        %1469 = vmatmul.mubr.f32.gmra.mrb[0].mxu0 %v1400
        %v1470 = vpop.f32.mrb[0].mxu0
        %v1471 = vadd.f32 %v770, %v1470
        %v1472 = vpop.f32.mrb[0].mxu0
        %1473 = vdwg.mxu0
        %v1474 = vsel %vm1138, %v1471, -inf
        %1475 = vmax.xlane.f32.xlu0 %v1474
        %v1476 = vpop.xlane.xlu0 %1475
        %v1477 = vsub.f32 %v1471, %v1476
        %v1478 = vmul.f32 %v1477, 1.442695
        %v1479 = vpow.pop %v1478
        %v1480 = vsel %vm1138, %v1479, 0.0
        %1481 = vadd.xlane.f32.xlu0 %v1480
        %v1482 = vpop.xlane.xlu0 %1481
        %v1483 = vrcp.pop %v1482
        %v1484 = vmul.f32 %v1479, %v1483
        %1485 = vrot.lane.b32.xlu0 %v1055, 64
        %v1486 = vpop.permute.xlu0 %1485
        %v1489 = vsel %vm1138, %v1484, 0
        %1491 = vmatprep.subr.mxu0 0.0
        %1492 = vmatpush1.msra.mxu0 %v1486
        %1493 = vmatprep.subr.mxu0 0.0
        %1494 = vmatpush1.msra.mxu0 0.0
        %1495 = vmatprep.subr.mxu0 0.0
        %1496 = vmatpush1.msra.mxu0 0.0
        %1497 = vmatprep.subr.mxu0 0.0
        %1498 = vmatpush1.msra.mxu0 0.0
        %1499 = vmatprep.subr.mxu0 0.0
        %1500 = vmatpush1.msra.mxu0 0.0
        %1501 = vmatprep.subr.mxu0 0.0
        %1502 = vmatpush1.msra.mxu0 0.0
        %1503 = vmatprep.subr.mxu0 0.0
        %1504 = vmatpush1.msra.mxu0 0.0
        %1505 = vmatprep.subr.mxu0 0.0
        %1506 = vmatpush1.msra.mxu0 0.0
        %1507 = vmatprep.subr.mxu0 0.0
        %1508 = vmatpush1.msra.mxu0 0.0
        %1509 = vmatprep.subr.mxu0 0.0
        %1510 = vmatpush1.msra.mxu0 0.0
        %1511 = vmatprep.subr.mxu0 0.0
        %1512 = vmatpush1.msra.mxu0 0.0
        %1513 = vmatprep.subr.mxu0 0.0
        %1514 = vmatpush1.msra.mxu0 0.0
        %1515 = vmatprep.subr.mxu0 0.0
        %1516 = vmatpush1.msra.mxu0 0.0
        %1517 = vmatprep.subr.mxu0 0.0
        %1518 = vmatpush1.msra.mxu0 0.0
        %1519 = vmatprep.subr.mxu0 0.0
        %1520 = vmatpush1.msra.mxu0 0.0
        %1521 = vmatprep.subr.mxu0 0.0
        %1522 = vmatpush1.msra.mxu0 0.0
        %1523 = vmatprep.subr.mxu0 0.0
        %1524 = vmatpush1.msra.mxu0 0.0
        %1525 = vmatprep.subr.mxu0 0.0
        %1526 = vmatpush1.msra.mxu0 0.0
        %1527 = vmatprep.subr.mxu0 0.0
        %1528 = vmatpush1.msra.mxu0 0.0
        %1529 = vmatprep.subr.mxu0 0.0
        %1530 = vmatpush1.msra.mxu0 0.0
        %1531 = vmatprep.subr.mxu0 0.0
        %1532 = vmatpush1.msra.mxu0 0.0
        %1533 = vmatprep.subr.mxu0 0.0
        %1534 = vmatpush1.msra.mxu0 0.0
        %1535 = vmatprep.subr.mxu0 0.0
        %1536 = vmatpush1.msra.mxu0 0.0
        %1537 = vmatprep.subr.mxu0 0.0
        %1538 = vmatpush1.msra.mxu0 0.0
        %1539 = vmatprep.subr.mxu0 0.0
        %1540 = vmatpush1.msra.mxu0 0.0
        %1541 = vmatprep.subr.mxu0 0.0
        %1542 = vmatpush1.msra.mxu0 0.0
        %1543 = vmatprep.subr.mxu0 0.0
        %1544 = vmatpush1.msra.mxu0 0.0
        %1545 = vmatprep.subr.mxu0 0.0
        %1546 = vmatpush1.msra.mxu0 0.0
        %1547 = vmatprep.subr.mxu0 0.0
        %1548 = vmatpush1.msra.mxu0 0.0
        %1549 = vmatprep.subr.mxu0 0.0
        %1550 = vmatpush1.msra.mxu0 0.0
        %1551 = vmatprep.subr.mxu0 0.0
        %1552 = vmatpush1.msra.mxu0 0.0
        %1553 = vmatprep.subr.mxu0 0.0
        %1554 = vmatpush1.msra.mxu0 0.0
        %1555 = vmatprep.mubr.f32.mxu0 0.0
        %1556 = vmatmul.mubr.f32.gmra.mrb[0].mxu0 %v1489
        %v1557 = vpop.f32.mrb[0].mxu0
        %v1558 = vadd.f32 0.0, %v1557
        %v1559 = vpop.f32.mrb[0].mxu0
        %1560 = vdwg.mxu0
        %1562 = vrot.lane.b32.xlu0 %v1558, 64
        %v1563 = vpop.permute.xlu0 %1562
        %vm1565 = vcmask 785920
        %1566 = vst.msk [vmem:[#allocation2] sm:$0xff] %vm1565, %v1563
        %1567 = vrot.lane.b32.xlu0 %v1060, 32
        %v1568 = vpop.permute.xlu0 %1567
        %1569 = vrot.lane.b32.xlu0 %v1016, 32
        %v1570 = vpop.permute.xlu0 %1569
        %v1571 = vsel %vm1061, %v1568, 0
        %v1573 = vsel %vm1061, %v1570, 0
        %1575 = vmatprep.subr.mxu0 0.0
        %1576 = vmatpush1.xpose.msra.mxu0 %v1573
        %1577 = vmatprep.subr.mxu0 0.0
        %1578 = vmatpush1.xpose.msra.mxu0 0.0
        %1579 = vmatprep.subr.mxu0 0.0
        %1580 = vmatpush1.xpose.msra.mxu0 0.0
        %1581 = vmatprep.subr.mxu0 0.0
        %1582 = vmatpush1.xpose.msra.mxu0 0.0
        %1583 = vmatprep.subr.mxu0 0.0
        %1584 = vmatpush1.xpose.msra.mxu0 0.0
        %1585 = vmatprep.subr.mxu0 0.0
        %1586 = vmatpush1.xpose.msra.mxu0 0.0
        %1587 = vmatprep.subr.mxu0 0.0
        %1588 = vmatpush1.xpose.msra.mxu0 0.0
        %1589 = vmatprep.subr.mxu0 0.0
        %1590 = vmatpush1.xpose.msra.mxu0 0.0
        %1591 = vmatprep.subr.mxu0 0.0
        %1592 = vmatpush1.xpose.msra.mxu0 0.0
        %1593 = vmatprep.subr.mxu0 0.0
        %1594 = vmatpush1.xpose.msra.mxu0 0.0
        %1595 = vmatprep.subr.mxu0 0.0
        %1596 = vmatpush1.xpose.msra.mxu0 0.0
        %1597 = vmatprep.subr.mxu0 0.0
        %1598 = vmatpush1.xpose.msra.mxu0 0.0
        %1599 = vmatprep.subr.mxu0 0.0
        %1600 = vmatpush1.xpose.msra.mxu0 0.0
        %1601 = vmatprep.subr.mxu0 0.0
        %1602 = vmatpush1.xpose.msra.mxu0 0.0
        %1603 = vmatprep.subr.mxu0 0.0
        %1604 = vmatpush1.xpose.msra.mxu0 0.0
        %1605 = vmatprep.subr.mxu0 0.0
        %1606 = vmatpush1.xpose.msra.mxu0 0.0
        %1607 = vmatprep.subr.mxu0 0.0
        %1608 = vmatpush1.xpose.msra.mxu0 0.0
        %1609 = vmatprep.subr.mxu0 0.0
        %1610 = vmatpush1.xpose.msra.mxu0 0.0
        %1611 = vmatprep.subr.mxu0 0.0
        %1612 = vmatpush1.xpose.msra.mxu0 0.0
        %1613 = vmatprep.subr.mxu0 0.0
        %1614 = vmatpush1.xpose.msra.mxu0 0.0
        %1615 = vmatprep.subr.mxu0 0.0
        %1616 = vmatpush1.xpose.msra.mxu0 0.0
        %1617 = vmatprep.subr.mxu0 0.0
        %1618 = vmatpush1.xpose.msra.mxu0 0.0
        %1619 = vmatprep.subr.mxu0 0.0
        %1620 = vmatpush1.xpose.msra.mxu0 0.0
        %1621 = vmatprep.subr.mxu0 0.0
        %1622 = vmatpush1.xpose.msra.mxu0 0.0
        %1623 = vmatprep.subr.mxu0 0.0
        %1624 = vmatpush1.xpose.msra.mxu0 0.0
        %1625 = vmatprep.subr.mxu0 0.0
        %1626 = vmatpush1.xpose.msra.mxu0 0.0
        %1627 = vmatprep.subr.mxu0 0.0
        %1628 = vmatpush1.xpose.msra.mxu0 0.0
        %1629 = vmatprep.subr.mxu0 0.0
        %1630 = vmatpush1.xpose.msra.mxu0 0.0
        %1631 = vmatprep.subr.mxu0 0.0
        %1632 = vmatpush1.xpose.msra.mxu0 0.0
        %1633 = vmatprep.subr.mxu0 0.0
        %1634 = vmatpush1.xpose.msra.mxu0 0.0
        %1635 = vmatprep.subr.mxu0 0.0
        %1636 = vmatpush1.xpose.msra.mxu0 0.0
        %1637 = vmatprep.subr.mxu0 0.0
        %1638 = vmatpush1.xpose.msra.mxu0 0.0
        %1639 = vmatprep.mubr.f32.mxu0 0.0
        %1640 = vmatmul.mubr.f32.gmra.mrb[0].mxu0 %v1571
        %v1641 = vpop.f32.mrb[0].mxu0
        %v1642 = vadd.f32 %v770, %v1641
        %v1643 = vpop.f32.mrb[0].mxu0
        %1644 = vdwg.mxu0
        %v1645 = vsel %vm1138, %v1642, -inf
        %1646 = vmax.xlane.f32.xlu0 %v1645
        %v1647 = vpop.xlane.xlu0 %1646
        %v1648 = vsub.f32 %v1642, %v1647
        %v1649 = vmul.f32 %v1648, 1.442695
        %v1650 = vpow.pop %v1649
        %v1651 = vsel %vm1138, %v1650, 0.0
        %1652 = vadd.xlane.f32.xlu0 %v1651
        %v1653 = vpop.xlane.xlu0 %1652
        %v1654 = vrcp.pop %v1653
        %v1655 = vmul.f32 %v1650, %v1654
        %1656 = vrot.lane.b32.xlu0 %v1055, 32
        %v1657 = vpop.permute.xlu0 %1656
        %v1660 = vsel %vm1138, %v1655, 0
        %1662 = vmatprep.subr.mxu0 0.0
        %1663 = vmatpush1.msra.mxu0 %v1657
        %1664 = vmatprep.subr.mxu0 0.0
        %1665 = vmatpush1.msra.mxu0 0.0
        %1666 = vmatprep.subr.mxu0 0.0
        %1667 = vmatpush1.msra.mxu0 0.0
        %1668 = vmatprep.subr.mxu0 0.0
        %1669 = vmatpush1.msra.mxu0 0.0
        %1670 = vmatprep.subr.mxu0 0.0
        %1671 = vmatpush1.msra.mxu0 0.0
        %1672 = vmatprep.subr.mxu0 0.0
        %1673 = vmatpush1.msra.mxu0 0.0
        %1674 = vmatprep.subr.mxu0 0.0
        %1675 = vmatpush1.msra.mxu0 0.0
        %1676 = vmatprep.subr.mxu0 0.0
        %1677 = vmatpush1.msra.mxu0 0.0
        %1678 = vmatprep.subr.mxu0 0.0
        %1679 = vmatpush1.msra.mxu0 0.0
        %1680 = vmatprep.subr.mxu0 0.0
        %1681 = vmatpush1.msra.mxu0 0.0
        %1682 = vmatprep.subr.mxu0 0.0
        %1683 = vmatpush1.msra.mxu0 0.0
        %1684 = vmatprep.subr.mxu0 0.0
        %1685 = vmatpush1.msra.mxu0 0.0
        %1686 = vmatprep.subr.mxu0 0.0
        %1687 = vmatpush1.msra.mxu0 0.0
        %1688 = vmatprep.subr.mxu0 0.0
        %1689 = vmatpush1.msra.mxu0 0.0
        %1690 = vmatprep.subr.mxu0 0.0
        %1691 = vmatpush1.msra.mxu0 0.0
        %1692 = vmatprep.subr.mxu0 0.0
        %1693 = vmatpush1.msra.mxu0 0.0
        %1694 = vmatprep.subr.mxu0 0.0
        %1695 = vmatpush1.msra.mxu0 0.0
        %1696 = vmatprep.subr.mxu0 0.0
        %1697 = vmatpush1.msra.mxu0 0.0
        %1698 = vmatprep.subr.mxu0 0.0
        %1699 = vmatpush1.msra.mxu0 0.0
        %1700 = vmatprep.subr.mxu0 0.0
        %1701 = vmatpush1.msra.mxu0 0.0
        %1702 = vmatprep.subr.mxu0 0.0
        %1703 = vmatpush1.msra.mxu0 0.0
        %1704 = vmatprep.subr.mxu0 0.0
        %1705 = vmatpush1.msra.mxu0 0.0
        %1706 = vmatprep.subr.mxu0 0.0
        %1707 = vmatpush1.msra.mxu0 0.0
        %1708 = vmatprep.subr.mxu0 0.0
        %1709 = vmatpush1.msra.mxu0 0.0
        %1710 = vmatprep.subr.mxu0 0.0
        %1711 = vmatpush1.msra.mxu0 0.0
        %1712 = vmatprep.subr.mxu0 0.0
        %1713 = vmatpush1.msra.mxu0 0.0
        %1714 = vmatprep.subr.mxu0 0.0
        %1715 = vmatpush1.msra.mxu0 0.0
        %1716 = vmatprep.subr.mxu0 0.0
        %1717 = vmatpush1.msra.mxu0 0.0
        %1718 = vmatprep.subr.mxu0 0.0
        %1719 = vmatpush1.msra.mxu0 0.0
        %1720 = vmatprep.subr.mxu0 0.0
        %1721 = vmatpush1.msra.mxu0 0.0
        %1722 = vmatprep.subr.mxu0 0.0
        %1723 = vmatpush1.msra.mxu0 0.0
        %1724 = vmatprep.subr.mxu0 0.0
        %1725 = vmatpush1.msra.mxu0 0.0
        %1726 = vmatprep.mubr.f32.mxu0 0.0
        %1727 = vmatmul.mubr.f32.gmra.mrb[0].mxu0 %v1660
        %v1728 = vpop.f32.mrb[0].mxu0
        %v1729 = vadd.f32 0.0, %v1728
        %v1730 = vpop.f32.mrb[0].mxu0
        %1731 = vdwg.mxu0
        %1733 = vrot.lane.b32.xlu0 %v1729, 96
        %v1734 = vpop.permute.xlu0 %1733
        %vm1736 = vcmask 1048320
        %1737 = vst.msk [vmem:[#allocation2] sm:$0xff] %vm1736, %v1734
        %v1738 = vld [vmem:[#allocation2] sm:$0xff]
        %v1739 = vpack.c.bf16 %v1738, %v1738
        %v1740 = vld [vmem:[%s740] sm:$0xf]
        %v1741 = vld [vmem:[%s740 + $0x4] sm:$0xf]
        %v1742 = vld [vmem:[%s740 + $0x8] sm:$0xf]
        %v1743 = vld [vmem:[%s740 + $0xc] sm:$0xf]
        %v1744 = vld [vmem:[%s740 + $0x10] sm:$0xf]
        %v1745 = vld [vmem:[%s740 + $0x14] sm:$0xf]
        %v1746 = vld [vmem:[%s740 + $0x18] sm:$0xf]
        %v1747 = vld [vmem:[%s740 + $0x1c] sm:$0xf]
        %v1748 = vld [vmem:[%s740 + $0x20] sm:$0xf]
        %v1749 = vld [vmem:[%s740 + $0x24] sm:$0xf]
        %v1750 = vld [vmem:[%s740 + $0x28] sm:$0xf]
        %v1751 = vld [vmem:[%s740 + $0x2c] sm:$0xf]
        %v1752 = vld [vmem:[%s740 + $0x30] sm:$0xf]
        %v1753 = vld [vmem:[%s740 + $0x34] sm:$0xf]
        %v1754 = vld [vmem:[%s740 + $0x38] sm:$0xf]
        %v1755 = vld [vmem:[%s740 + $0x3c] sm:$0xf]
        %v1756 = vld [vmem:[%s743] sm:$0x1]
        %v1758 = vlaneseq
        %v1759 = vshrl.u32 %v1758, 7
        %v1760 = vsub.s32 0, %v1759
        %v1761 = vrot.slane %v1756, %v1760
        %v1779 = vunpack.c.l.b16 %v1740
        %v1780 = vunpack.c.l.b16 %v1741
        %v1781 = vunpack.c.l.b16 %v1742
        %v1782 = vunpack.c.l.b16 %v1743
        %v1783 = vunpack.c.l.b16 %v1744
        %v1784 = vunpack.c.l.b16 %v1745
        %v1785 = vunpack.c.l.b16 %v1746
        %v1786 = vunpack.c.l.b16 %v1747
        %v1787 = vunpack.c.l.b16 %v1748
        %v1788 = vunpack.c.l.b16 %v1749
        %v1789 = vunpack.c.l.b16 %v1750
        %v1790 = vunpack.c.l.b16 %v1751
        %v1791 = vunpack.c.l.b16 %v1752
        %v1792 = vunpack.c.l.b16 %v1753
        %v1793 = vunpack.c.l.b16 %v1754
        %v1794 = vunpack.c.l.b16 %v1755
        %v1795 = vpack.c.b16 %v1780, %v1779
        %v1796 = vpack.c.b16 %v1782, %v1781
        %v1797 = vpack.c.b16 %v1784, %v1783
        %v1798 = vpack.c.b16 %v1786, %v1785
        %v1799 = vpack.c.b16 %v1788, %v1787
        %v1800 = vpack.c.b16 %v1790, %v1789
        %v1801 = vpack.c.b16 %v1792, %v1791
        %v1802 = vpack.c.b16 %v1794, %v1793
        %1811 = vmatprep.subr.bf16.mxu0 0
        %1812 = vmatpush1.bf16.msra.mxu0 %v1795
        %1813 = vmatprep.subr.bf16.mxu0 0
        %1814 = vmatpush1.bf16.msra.mxu0 %v1796
        %1815 = vmatprep.subr.bf16.mxu0 0
        %1816 = vmatpush1.bf16.msra.mxu0 %v1797
        %1817 = vmatprep.subr.bf16.mxu0 0
        %1818 = vmatpush1.bf16.msra.mxu0 %v1798
        %1819 = vmatprep.subr.bf16.mxu0 0
        %1820 = vmatpush1.bf16.msra.mxu0 %v1799
        %1821 = vmatprep.subr.bf16.mxu0 0
        %1822 = vmatpush1.bf16.msra.mxu0 %v1800
        %1823 = vmatprep.subr.bf16.mxu0 0
        %1824 = vmatpush1.bf16.msra.mxu0 %v1801
        %1825 = vmatprep.subr.bf16.mxu0 0
        %1826 = vmatpush1.bf16.msra.mxu0 %v1802
        %1827 = vmatprep.subr.bf16.mxu0 0
        %1828 = vmatpush1.bf16.msra.mxu0 0
        %1829 = vmatprep.subr.bf16.mxu0 0
        %1830 = vmatpush1.bf16.msra.mxu0 0
        %1831 = vmatprep.subr.bf16.mxu0 0
        %1832 = vmatpush1.bf16.msra.mxu0 0
        %1833 = vmatprep.subr.bf16.mxu0 0
        %1834 = vmatpush1.bf16.msra.mxu0 0
        %1835 = vmatprep.subr.bf16.mxu0 0
        %1836 = vmatpush1.bf16.msra.mxu0 0
        %1837 = vmatprep.subr.bf16.mxu0 0
        %1838 = vmatpush1.bf16.msra.mxu0 0
        %1839 = vmatprep.subr.bf16.mxu0 0
        %1840 = vmatpush1.bf16.msra.mxu0 0
        %1841 = vmatprep.subr.bf16.mxu0 0
        %1842 = vmatpush1.bf16.msra.mxu0 0
        %1843 = vmatprep.mubr.bf16.mxu0 0
        %1844 = vmatmul.mubr.bf16.gmra.mrb[0].mxu0 %v1739
        %v1845 = vpop.f32.mrb[0].mxu0
        %v1846 = vadd.f32 %v1761, %v1845
        %v1847 = vpop.f32.mrb[0].mxu0
        %v1848 = vpop.f32.mrb[0].mxu0
        %v1849 = vpop.f32.mrb[0].mxu0
        %1850 = vdwg.mxu0
        %v1851 = vadd.f32 %v764, %v1846
        %v1852 = vld [vmem:[%s746] sm:$0x1]
        %v1853 = vld [vmem:[%s749] sm:$0x1]
        %1854 = vadd.xlane.f32.xlu0 %v1851
        %v1855 = vpop.xlane.xlu0 %1854
        %v1856 = vmul.f32 %v1855, %v775
        %v1857 = vmul.f32 %v1851, %v1851
        %1858 = vadd.xlane.f32.xlu0 %v1857
        %v1859 = vpop.xlane.xlu0 %1858
        %v1860 = vmul.f32 %v1859, %v775
        %v1861 = vmul.f32 %v1856, %v1856
        %v1862 = vsub.f32 %v1860, %v1861
        %v1863 = vsub.f32 %v1851, %v1856
        %v1864 = vadd.f32 %v1862, 1e-05
        %v1865 = vrsqrt.pop %v1864
        %v1866 = vmul.f32 %v1863, %v1865
        %v1868 = vlaneseq
        %v1869 = vshrl.u32 %v1868, 7
        %v1870 = vsub.s32 0, %v1869
        %v1871 = vrot.slane %v1852, %v1870
        %v1873 = vmul.f32 %v1866, %v1871
        %v1875 = vlaneseq
        %v1876 = vshrl.u32 %v1875, 7
        %v1877 = vsub.s32 0, %v1876
        %v1878 = vrot.slane %v1853, %v1877
        %v1880 = vadd.f32 %v1873, %v1878
        %v1881 = vpack.c.bf16 %v1880, %v1880
        %v1882 = vld [vmem:[%s621] sm:$0xff]
        %v1883 = vld [vmem:[%s621 + $0x8] sm:$0xff]
        %v1884 = vld [vmem:[%s621 + $0x10] sm:$0xff]
        %v1885 = vld [vmem:[%s621 + $0x18] sm:$0xff]
        %v1886 = vld [vmem:[%s621 + $0x20] sm:$0xff]
        %v1887 = vld [vmem:[%s621 + $0x28] sm:$0xff]
        %v1888 = vld [vmem:[%s621 + $0x30] sm:$0xff]
        %v1889 = vld [vmem:[%s621 + $0x38] sm:$0xff]
        %v1890 = vld [vmem:[%s621 + $0x40] sm:$0xff]
        %v1891 = vld [vmem:[%s621 + $0x48] sm:$0xff]
        %v1892 = vld [vmem:[%s621 + $0x50] sm:$0xff]
        %v1893 = vld [vmem:[%s621 + $0x58] sm:$0xff]
        %v1894 = vld [vmem:[%s621 + $0x60] sm:$0xff]
        %v1895 = vld [vmem:[%s621 + $0x68] sm:$0xff]
        %v1896 = vld [vmem:[%s621 + $0x70] sm:$0xff]
        %v1897 = vld [vmem:[%s621 + $0x78] sm:$0xff]
        %v1898 = vld [vmem:[%s621 + $0x80] sm:$0xff]
        %v1899 = vld [vmem:[%s621 + $0x88] sm:$0xff]
        %v1900 = vld [vmem:[%s621 + $0x90] sm:$0xff]
        %v1901 = vld [vmem:[%s621 + $0x98] sm:$0xff]
        %v1902 = vld [vmem:[%s621 + $0xa0] sm:$0xff]
        %v1903 = vld [vmem:[%s621 + $0xa8] sm:$0xff]
        %v1904 = vld [vmem:[%s621 + $0xb0] sm:$0xff]
        %v1905 = vld [vmem:[%s621 + $0xb8] sm:$0xff]
        %v1906 = vld [vmem:[%s621 + $0xc0] sm:$0xff]
        %v1907 = vld [vmem:[%s621 + $0xc8] sm:$0xff]
        %v1908 = vld [vmem:[%s621 + $0xd0] sm:$0xff]
        %v1909 = vld [vmem:[%s621 + $0xd8] sm:$0xff]
        %v1910 = vld [vmem:[%s621 + $0xe0] sm:$0xff]
        %v1911 = vld [vmem:[%s621 + $0xe8] sm:$0xff]
        %v1912 = vld [vmem:[%s621 + $0xf0] sm:$0xff]
        %v1913 = vld [vmem:[%s621 + $0xf8] sm:$0xff]
        %v1914 = vld [vmem:[%s753] sm:$0xf]
        %v1916 = vlaneseq
        %v1917 = vshrl.u32 %v1916, 7
        %v1918 = vsub.s32 0, %v1917
        %v1919 = vrot.slane %v1914, %v1918
        %v1920 = vlaneseq
        %v1921 = vshrl.u32 %v1920, 7
        %v1922 = vsub.s32 1, %v1921
        %v1923 = vrot.slane %v1914, %v1922
        %v1924 = vlaneseq
        %v1925 = vshrl.u32 %v1924, 7
        %v1926 = vsub.s32 2, %v1925
        %v1927 = vrot.slane %v1914, %v1926
        %v1928 = vlaneseq
        %v1929 = vshrl.u32 %v1928, 7
        %v1930 = vsub.s32 3, %v1929
        %v1931 = vrot.slane %v1914, %v1930
        %v1968 = vunpack.c.l.b16 %v1882
        %v1969 = vunpack.c.h.b16 %v1882
        %v1970 = vunpack.c.l.b16 %v1883
        %v1971 = vunpack.c.h.b16 %v1883
        %v1972 = vunpack.c.l.b16 %v1884
        %v1973 = vunpack.c.h.b16 %v1884
        %v1974 = vunpack.c.l.b16 %v1885
        %v1975 = vunpack.c.h.b16 %v1885
        %v1976 = vunpack.c.l.b16 %v1886
        %v1977 = vunpack.c.h.b16 %v1886
        %v1978 = vunpack.c.l.b16 %v1887
        %v1979 = vunpack.c.h.b16 %v1887
        %v1980 = vunpack.c.l.b16 %v1888
        %v1981 = vunpack.c.h.b16 %v1888
        %v1982 = vunpack.c.l.b16 %v1889
        %v1983 = vunpack.c.h.b16 %v1889
        %v1984 = vunpack.c.l.b16 %v1890
        %v1985 = vunpack.c.h.b16 %v1890
        %v1986 = vunpack.c.l.b16 %v1891
        %v1987 = vunpack.c.h.b16 %v1891
        %v1988 = vunpack.c.l.b16 %v1892
        %v1989 = vunpack.c.h.b16 %v1892
        %v1990 = vunpack.c.l.b16 %v1893
        %v1991 = vunpack.c.h.b16 %v1893
        %v1992 = vunpack.c.l.b16 %v1894
        %v1993 = vunpack.c.h.b16 %v1894
        %v1994 = vunpack.c.l.b16 %v1895
        %v1995 = vunpack.c.h.b16 %v1895
        %v1996 = vunpack.c.l.b16 %v1896
        %v1997 = vunpack.c.h.b16 %v1896
        %v1998 = vunpack.c.l.b16 %v1897
        %v1999 = vunpack.c.h.b16 %v1897
        %v2000 = vunpack.c.l.b16 %v1898
        %v2001 = vunpack.c.h.b16 %v1898
        %v2002 = vunpack.c.l.b16 %v1899
        %v2003 = vunpack.c.h.b16 %v1899
        %v2004 = vunpack.c.l.b16 %v1900
        %v2005 = vunpack.c.h.b16 %v1900
        %v2006 = vunpack.c.l.b16 %v1901
        %v2007 = vunpack.c.h.b16 %v1901
        %v2008 = vunpack.c.l.b16 %v1902
        %v2009 = vunpack.c.h.b16 %v1902
        %v2010 = vunpack.c.l.b16 %v1903
        %v2011 = vunpack.c.h.b16 %v1903
        %v2012 = vunpack.c.l.b16 %v1904
        %v2013 = vunpack.c.h.b16 %v1904
        %v2014 = vunpack.c.l.b16 %v1905
        %v2015 = vunpack.c.h.b16 %v1905
        %v2016 = vunpack.c.l.b16 %v1906
        %v2017 = vunpack.c.h.b16 %v1906
        %v2018 = vunpack.c.l.b16 %v1907
        %v2019 = vunpack.c.h.b16 %v1907
        %v2020 = vunpack.c.l.b16 %v1908
        %v2021 = vunpack.c.h.b16 %v1908
        %v2022 = vunpack.c.l.b16 %v1909
        %v2023 = vunpack.c.h.b16 %v1909
        %v2024 = vunpack.c.l.b16 %v1910
        %v2025 = vunpack.c.h.b16 %v1910
        %v2026 = vunpack.c.l.b16 %v1911
        %v2027 = vunpack.c.h.b16 %v1911
        %v2028 = vunpack.c.l.b16 %v1912
        %v2029 = vunpack.c.h.b16 %v1912
        %v2030 = vunpack.c.l.b16 %v1913
        %v2031 = vunpack.c.h.b16 %v1913
        %v2032 = vpack.c.b16 %v1972, %v1968
        %v2033 = vpack.c.b16 %v1973, %v1969
        %v2034 = vpack.c.b16 %v1974, %v1970
        %v2035 = vpack.c.b16 %v1975, %v1971
        %v2036 = vpack.c.b16 %v1980, %v1976
        %v2037 = vpack.c.b16 %v1981, %v1977
        %v2038 = vpack.c.b16 %v1982, %v1978
        %v2039 = vpack.c.b16 %v1983, %v1979
        %v2040 = vpack.c.b16 %v1988, %v1984
        %v2041 = vpack.c.b16 %v1989, %v1985
        %v2042 = vpack.c.b16 %v1990, %v1986
        %v2043 = vpack.c.b16 %v1991, %v1987
        %v2044 = vpack.c.b16 %v1996, %v1992
        %v2045 = vpack.c.b16 %v1997, %v1993
        %v2046 = vpack.c.b16 %v1998, %v1994
        %v2047 = vpack.c.b16 %v1999, %v1995
        %v2048 = vpack.c.b16 %v2004, %v2000
        %v2049 = vpack.c.b16 %v2005, %v2001
        %v2050 = vpack.c.b16 %v2006, %v2002
        %v2051 = vpack.c.b16 %v2007, %v2003
        %v2052 = vpack.c.b16 %v2012, %v2008
        %v2053 = vpack.c.b16 %v2013, %v2009
        %v2054 = vpack.c.b16 %v2014, %v2010
        %v2055 = vpack.c.b16 %v2015, %v2011
        %v2056 = vpack.c.b16 %v2020, %v2016
        %v2057 = vpack.c.b16 %v2021, %v2017
        %v2058 = vpack.c.b16 %v2022, %v2018
        %v2059 = vpack.c.b16 %v2023, %v2019
        %v2060 = vpack.c.b16 %v2028, %v2024
        %v2061 = vpack.c.b16 %v2029, %v2025
        %v2062 = vpack.c.b16 %v2030, %v2026
        %v2063 = vpack.c.b16 %v2031, %v2027
        %2096 = vmatprep.subr.bf16.mxu0 %v2033
        %2097 = vmatpush1.bf16.msra.mxu0 %v2032
        %2098 = vmatprep.subr.bf16.mxu0 %v2037
        %2099 = vmatpush1.bf16.msra.mxu0 %v2036
        %2100 = vmatprep.subr.bf16.mxu0 %v2041
        %2101 = vmatpush1.bf16.msra.mxu0 %v2040
        %2102 = vmatprep.subr.bf16.mxu0 %v2045
        %2103 = vmatpush1.bf16.msra.mxu0 %v2044
        %2104 = vmatprep.subr.bf16.mxu0 %v2049
        %2105 = vmatpush1.bf16.msra.mxu0 %v2048
        %2106 = vmatprep.subr.bf16.mxu0 %v2053
        %2107 = vmatpush1.bf16.msra.mxu0 %v2052
        %2108 = vmatprep.subr.bf16.mxu0 %v2057
        %2109 = vmatpush1.bf16.msra.mxu0 %v2056
        %2110 = vmatprep.subr.bf16.mxu0 %v2061
        %2111 = vmatpush1.bf16.msra.mxu0 %v2060
        %2112 = vmatprep.subr.bf16.mxu0 0
        %2113 = vmatpush1.bf16.msra.mxu0 0
        %2114 = vmatprep.subr.bf16.mxu0 0
        %2115 = vmatpush1.bf16.msra.mxu0 0
        %2116 = vmatprep.subr.bf16.mxu0 0
        %2117 = vmatpush1.bf16.msra.mxu0 0
        %2118 = vmatprep.subr.bf16.mxu0 0
        %2119 = vmatpush1.bf16.msra.mxu0 0
        %2120 = vmatprep.subr.bf16.mxu0 0
        %2121 = vmatpush1.bf16.msra.mxu0 0
        %2122 = vmatprep.subr.bf16.mxu0 0
        %2123 = vmatpush1.bf16.msra.mxu0 0
        %2124 = vmatprep.subr.bf16.mxu0 0
        %2125 = vmatpush1.bf16.msra.mxu0 0
        %2126 = vmatprep.subr.bf16.mxu0 0
        %2127 = vmatpush1.bf16.msra.mxu0 0
        %2128 = vmatprep.mubr.bf16.mxu0 0
        %2129 = vmatmul.mubr.bf16.gmra.mrb[0].mxu0 %v1881
        %v2130 = vpop.f32.mrb[0].mxu0
        %v2131 = vadd.f32 %v1919, %v2130
        %v2132 = vpop.f32.mrb[0].mxu0
        %v2133 = vadd.f32 %v1923, %v2132
        %v2134 = vpop.f32.mrb[0].mxu0
        %v2135 = vpop.f32.mrb[0].mxu0
        %2136 = vdwg.mxu0
        %2137 = vmatprep.subr.bf16.mxu0 %v2035
        %2138 = vmatpush1.bf16.msra.mxu0 %v2034
        %2139 = vmatprep.subr.bf16.mxu0 %v2039
        %2140 = vmatpush1.bf16.msra.mxu0 %v2038
        %2141 = vmatprep.subr.bf16.mxu0 %v2043
        %2142 = vmatpush1.bf16.msra.mxu0 %v2042
        %2143 = vmatprep.subr.bf16.mxu0 %v2047
        %2144 = vmatpush1.bf16.msra.mxu0 %v2046
        %2145 = vmatprep.subr.bf16.mxu0 %v2051
        %2146 = vmatpush1.bf16.msra.mxu0 %v2050
        %2147 = vmatprep.subr.bf16.mxu0 %v2055
        %2148 = vmatpush1.bf16.msra.mxu0 %v2054
        %2149 = vmatprep.subr.bf16.mxu0 %v2059
        %2150 = vmatpush1.bf16.msra.mxu0 %v2058
        %2151 = vmatprep.subr.bf16.mxu0 %v2063
        %2152 = vmatpush1.bf16.msra.mxu0 %v2062
        %2153 = vmatprep.subr.bf16.mxu0 0
        %2154 = vmatpush1.bf16.msra.mxu0 0
        %2155 = vmatprep.subr.bf16.mxu0 0
        %2156 = vmatpush1.bf16.msra.mxu0 0
        %2157 = vmatprep.subr.bf16.mxu0 0
        %2158 = vmatpush1.bf16.msra.mxu0 0
        %2159 = vmatprep.subr.bf16.mxu0 0
        %2160 = vmatpush1.bf16.msra.mxu0 0
        %2161 = vmatprep.subr.bf16.mxu0 0
        %2162 = vmatpush1.bf16.msra.mxu0 0
        %2163 = vmatprep.subr.bf16.mxu0 0
        %2164 = vmatpush1.bf16.msra.mxu0 0
        %2165 = vmatprep.subr.bf16.mxu0 0
        %2166 = vmatpush1.bf16.msra.mxu0 0
        %2167 = vmatprep.subr.bf16.mxu0 0
        %2168 = vmatpush1.bf16.msra.mxu0 0
        %2169 = vmatprep.mubr.bf16.mxu0 0
        %2170 = vmatmul.mubr.bf16.gmra.mrb[0].mxu0 %v1881
        %v2171 = vpop.f32.mrb[0].mxu0
        %v2172 = vadd.f32 %v1927, %v2171
        %v2173 = vpop.f32.mrb[0].mxu0
        %v2174 = vadd.f32 %v1931, %v2173
        %v2175 = vpop.f32.mrb[0].mxu0
        %v2176 = vpop.f32.mrb[0].mxu0
        %2177 = vdwg.mxu0
        %v2178 = vmul.f32 %v2131, 1.702
        %v2179 = vmul.f32 %v2133, 1.702
        %v2180 = vmul.f32 %v2172, 1.702
        %v2181 = vmul.f32 %v2174, 1.702
        %v2182 = vxor.u32 %v2178, 2147483648
        %v2183 = vxor.u32 %v2179, 2147483648
        %v2184 = vxor.u32 %v2180, 2147483648
        %v2185 = vxor.u32 %v2181, 2147483648
        %v2186 = vmul.f32 %v2182, 1.442695
        %v2187 = vpow.pop %v2186
        %v2188 = vmul.f32 %v2183, 1.442695
        %v2189 = vpow.pop %v2188
        %v2190 = vmul.f32 %v2184, 1.442695
        %v2191 = vpow.pop %v2190
        %v2192 = vmul.f32 %v2185, 1.442695
        %v2193 = vpow.pop %v2192
        %v2194 = vadd.f32 %v2187, 1.0
        %v2195 = vadd.f32 %v2189, 1.0
        %v2196 = vadd.f32 %v2191, 1.0
        %v2197 = vadd.f32 %v2193, 1.0
        %v2198 = vrcp.pop %v2194
        %v2199 = vmul.f32 1.0, %v2198
        %v2200 = vrcp.pop %v2195
        %v2201 = vmul.f32 1.0, %v2200
        %v2202 = vrcp.pop %v2196
        %v2203 = vmul.f32 1.0, %v2202
        %v2204 = vrcp.pop %v2197
        %v2205 = vmul.f32 1.0, %v2204
        %v2206 = vmul.f32 %v2131, %v2199
        %v2207 = vmul.f32 %v2133, %v2201
        %v2208 = vmul.f32 %v2172, %v2203
        %v2209 = vmul.f32 %v2174, %v2205
        %v2210 = vpack.c.bf16 %v2206, %v2206
        %v2211 = vpack.c.bf16 %v2207, %v2207
        %v2212 = vpack.c.bf16 %v2208, %v2208
        %v2213 = vpack.c.bf16 %v2209, %v2209
        %v2214 = vld [vmem:[%s630] sm:$0xf]
        %v2215 = vld [vmem:[%s630 + $0x4] sm:$0xf]
        %v2216 = vld [vmem:[%s630 + $0x8] sm:$0xf]
        %v2217 = vld [vmem:[%s630 + $0xc] sm:$0xf]
        %v2218 = vld [vmem:[%s630 + $0x10] sm:$0xf]
        %v2219 = vld [vmem:[%s630 + $0x14] sm:$0xf]
        %v2220 = vld [vmem:[%s630 + $0x18] sm:$0xf]
        %v2221 = vld [vmem:[%s630 + $0x1c] sm:$0xf]
        %v2222 = vld [vmem:[%s630 + $0x20] sm:$0xf]
        %v2223 = vld [vmem:[%s630 + $0x24] sm:$0xf]
        %v2224 = vld [vmem:[%s630 + $0x28] sm:$0xf]
        %v2225 = vld [vmem:[%s630 + $0x2c] sm:$0xf]
        %v2226 = vld [vmem:[%s630 + $0x30] sm:$0xf]
        %v2227 = vld [vmem:[%s630 + $0x34] sm:$0xf]
        %v2228 = vld [vmem:[%s630 + $0x38] sm:$0xf]
        %v2229 = vld [vmem:[%s630 + $0x3c] sm:$0xf]
        %v2230 = vld [vmem:[%s630 + $0x40] sm:$0xf]
        %v2231 = vld [vmem:[%s630 + $0x44] sm:$0xf]
        %v2232 = vld [vmem:[%s630 + $0x48] sm:$0xf]
        %v2233 = vld [vmem:[%s630 + $0x4c] sm:$0xf]
        %v2234 = vld [vmem:[%s630 + $0x50] sm:$0xf]
        %v2235 = vld [vmem:[%s630 + $0x54] sm:$0xf]
        %v2236 = vld [vmem:[%s630 + $0x58] sm:$0xf]
        %v2237 = vld [vmem:[%s630 + $0x5c] sm:$0xf]
        %v2238 = vld [vmem:[%s630 + $0x60] sm:$0xf]
        %v2239 = vld [vmem:[%s630 + $0x64] sm:$0xf]
        %v2240 = vld [vmem:[%s630 + $0x68] sm:$0xf]
        %v2241 = vld [vmem:[%s630 + $0x6c] sm:$0xf]
        %v2242 = vld [vmem:[%s630 + $0x70] sm:$0xf]
        %v2243 = vld [vmem:[%s630 + $0x74] sm:$0xf]
        %v2244 = vld [vmem:[%s630 + $0x78] sm:$0xf]
        %v2245 = vld [vmem:[%s630 + $0x7c] sm:$0xf]
        %v2246 = vld [vmem:[%s630 + $0x80] sm:$0xf]
        %v2247 = vld [vmem:[%s630 + $0x84] sm:$0xf]
        %v2248 = vld [vmem:[%s630 + $0x88] sm:$0xf]
        %v2249 = vld [vmem:[%s630 + $0x8c] sm:$0xf]
        %v2250 = vld [vmem:[%s630 + $0x90] sm:$0xf]
        %v2251 = vld [vmem:[%s630 + $0x94] sm:$0xf]
        %v2252 = vld [vmem:[%s630 + $0x98] sm:$0xf]
        %v2253 = vld [vmem:[%s630 + $0x9c] sm:$0xf]
        %v2254 = vld [vmem:[%s630 + $0xa0] sm:$0xf]
        %v2255 = vld [vmem:[%s630 + $0xa4] sm:$0xf]
        %v2256 = vld [vmem:[%s630 + $0xa8] sm:$0xf]
        %v2257 = vld [vmem:[%s630 + $0xac] sm:$0xf]
        %v2258 = vld [vmem:[%s630 + $0xb0] sm:$0xf]
        %v2259 = vld [vmem:[%s630 + $0xb4] sm:$0xf]
        %v2260 = vld [vmem:[%s630 + $0xb8] sm:$0xf]
        %v2261 = vld [vmem:[%s630 + $0xbc] sm:$0xf]
        %v2262 = vld [vmem:[%s630 + $0xc0] sm:$0xf]
        %v2263 = vld [vmem:[%s630 + $0xc4] sm:$0xf]
        %v2264 = vld [vmem:[%s630 + $0xc8] sm:$0xf]
        %v2265 = vld [vmem:[%s630 + $0xcc] sm:$0xf]
        %v2266 = vld [vmem:[%s630 + $0xd0] sm:$0xf]
        %v2267 = vld [vmem:[%s630 + $0xd4] sm:$0xf]
        %v2268 = vld [vmem:[%s630 + $0xd8] sm:$0xf]
        %v2269 = vld [vmem:[%s630 + $0xdc] sm:$0xf]
        %v2270 = vld [vmem:[%s630 + $0xe0] sm:$0xf]
        %v2271 = vld [vmem:[%s630 + $0xe4] sm:$0xf]
        %v2272 = vld [vmem:[%s630 + $0xe8] sm:$0xf]
        %v2273 = vld [vmem:[%s630 + $0xec] sm:$0xf]
        %v2274 = vld [vmem:[%s630 + $0xf0] sm:$0xf]
        %v2275 = vld [vmem:[%s630 + $0xf4] sm:$0xf]
        %v2276 = vld [vmem:[%s630 + $0xf8] sm:$0xf]
        %v2277 = vld [vmem:[%s630 + $0xfc] sm:$0xf]
        %v2342 = vunpack.c.l.b16 %v2214
        %v2343 = vunpack.c.l.b16 %v2215
        %v2344 = vunpack.c.l.b16 %v2216
        %v2345 = vunpack.c.l.b16 %v2217
        %v2346 = vunpack.c.l.b16 %v2218
        %v2347 = vunpack.c.l.b16 %v2219
        %v2348 = vunpack.c.l.b16 %v2220
        %v2349 = vunpack.c.l.b16 %v2221
        %v2350 = vunpack.c.l.b16 %v2222
        %v2351 = vunpack.c.l.b16 %v2223
        %v2352 = vunpack.c.l.b16 %v2224
        %v2353 = vunpack.c.l.b16 %v2225
        %v2354 = vunpack.c.l.b16 %v2226
        %v2355 = vunpack.c.l.b16 %v2227
        %v2356 = vunpack.c.l.b16 %v2228
        %v2357 = vunpack.c.l.b16 %v2229
        %v2358 = vunpack.c.l.b16 %v2230
        %v2359 = vunpack.c.l.b16 %v2231
        %v2360 = vunpack.c.l.b16 %v2232
        %v2361 = vunpack.c.l.b16 %v2233
        %v2362 = vunpack.c.l.b16 %v2234
        %v2363 = vunpack.c.l.b16 %v2235
        %v2364 = vunpack.c.l.b16 %v2236
        %v2365 = vunpack.c.l.b16 %v2237
        %v2366 = vunpack.c.l.b16 %v2238
        %v2367 = vunpack.c.l.b16 %v2239
        %v2368 = vunpack.c.l.b16 %v2240
        %v2369 = vunpack.c.l.b16 %v2241
        %v2370 = vunpack.c.l.b16 %v2242
        %v2371 = vunpack.c.l.b16 %v2243
        %v2372 = vunpack.c.l.b16 %v2244
        %v2373 = vunpack.c.l.b16 %v2245
        %v2374 = vunpack.c.l.b16 %v2246
        %v2375 = vunpack.c.l.b16 %v2247
        %v2376 = vunpack.c.l.b16 %v2248
        %v2377 = vunpack.c.l.b16 %v2249
        %v2378 = vunpack.c.l.b16 %v2250
        %v2379 = vunpack.c.l.b16 %v2251
        %v2380 = vunpack.c.l.b16 %v2252
        %v2381 = vunpack.c.l.b16 %v2253
        %v2382 = vunpack.c.l.b16 %v2254
        %v2383 = vunpack.c.l.b16 %v2255
        %v2384 = vunpack.c.l.b16 %v2256
        %v2385 = vunpack.c.l.b16 %v2257
        %v2386 = vunpack.c.l.b16 %v2258
        %v2387 = vunpack.c.l.b16 %v2259
        %v2388 = vunpack.c.l.b16 %v2260
        %v2389 = vunpack.c.l.b16 %v2261
        %v2390 = vunpack.c.l.b16 %v2262
        %v2391 = vunpack.c.l.b16 %v2263
        %v2392 = vunpack.c.l.b16 %v2264
        %v2393 = vunpack.c.l.b16 %v2265
        %v2394 = vunpack.c.l.b16 %v2266
        %v2395 = vunpack.c.l.b16 %v2267
        %v2396 = vunpack.c.l.b16 %v2268
        %v2397 = vunpack.c.l.b16 %v2269
        %v2398 = vunpack.c.l.b16 %v2270
        %v2399 = vunpack.c.l.b16 %v2271
        %v2400 = vunpack.c.l.b16 %v2272
        %v2401 = vunpack.c.l.b16 %v2273
        %v2402 = vunpack.c.l.b16 %v2274
        %v2403 = vunpack.c.l.b16 %v2275
        %v2404 = vunpack.c.l.b16 %v2276
        %v2405 = vunpack.c.l.b16 %v2277
        %v2406 = vpack.c.b16 %v2343, %v2342
        %v2407 = vpack.c.b16 %v2345, %v2344
        %v2408 = vpack.c.b16 %v2347, %v2346
        %v2409 = vpack.c.b16 %v2349, %v2348
        %v2410 = vpack.c.b16 %v2351, %v2350
        %v2411 = vpack.c.b16 %v2353, %v2352
        %v2412 = vpack.c.b16 %v2355, %v2354
        %v2413 = vpack.c.b16 %v2357, %v2356
        %v2414 = vpack.c.b16 %v2359, %v2358
        %v2415 = vpack.c.b16 %v2361, %v2360
        %v2416 = vpack.c.b16 %v2363, %v2362
        %v2417 = vpack.c.b16 %v2365, %v2364
        %v2418 = vpack.c.b16 %v2367, %v2366
        %v2419 = vpack.c.b16 %v2369, %v2368
        %v2420 = vpack.c.b16 %v2371, %v2370
        %v2421 = vpack.c.b16 %v2373, %v2372
        %v2422 = vpack.c.b16 %v2375, %v2374
        %v2423 = vpack.c.b16 %v2377, %v2376
        %v2424 = vpack.c.b16 %v2379, %v2378
        %v2425 = vpack.c.b16 %v2381, %v2380
        %v2426 = vpack.c.b16 %v2383, %v2382
        %v2427 = vpack.c.b16 %v2385, %v2384
        %v2428 = vpack.c.b16 %v2387, %v2386
        %v2429 = vpack.c.b16 %v2389, %v2388
        %v2430 = vpack.c.b16 %v2391, %v2390
        %v2431 = vpack.c.b16 %v2393, %v2392
        %v2432 = vpack.c.b16 %v2395, %v2394
        %v2433 = vpack.c.b16 %v2397, %v2396
        %v2434 = vpack.c.b16 %v2399, %v2398
        %v2435 = vpack.c.b16 %v2401, %v2400
        %v2436 = vpack.c.b16 %v2403, %v2402
        %v2437 = vpack.c.b16 %v2405, %v2404
        %2470 = vmatprep.subr.bf16.mxu0 0
        %2471 = vmatpush1.bf16.msra.mxu0 %v2406
        %2472 = vmatprep.subr.bf16.mxu0 0
        %2473 = vmatpush1.bf16.msra.mxu0 %v2407
        %2474 = vmatprep.subr.bf16.mxu0 0
        %2475 = vmatpush1.bf16.msra.mxu0 %v2408
        %2476 = vmatprep.subr.bf16.mxu0 0
        %2477 = vmatpush1.bf16.msra.mxu0 %v2409
        %2478 = vmatprep.subr.bf16.mxu0 0
        %2479 = vmatpush1.bf16.msra.mxu0 %v2410
        %2480 = vmatprep.subr.bf16.mxu0 0
        %2481 = vmatpush1.bf16.msra.mxu0 %v2411
        %2482 = vmatprep.subr.bf16.mxu0 0
        %2483 = vmatpush1.bf16.msra.mxu0 %v2412
        %2484 = vmatprep.subr.bf16.mxu0 0
        %2485 = vmatpush1.bf16.msra.mxu0 %v2413
        %2486 = vmatprep.subr.bf16.mxu0 0
        %2487 = vmatpush1.bf16.msra.mxu0 %v2414
        %2488 = vmatprep.subr.bf16.mxu0 0
        %2489 = vmatpush1.bf16.msra.mxu0 %v2415
        %2490 = vmatprep.subr.bf16.mxu0 0
        %2491 = vmatpush1.bf16.msra.mxu0 %v2416
        %2492 = vmatprep.subr.bf16.mxu0 0
        %2493 = vmatpush1.bf16.msra.mxu0 %v2417
        %2494 = vmatprep.subr.bf16.mxu0 0
        %2495 = vmatpush1.bf16.msra.mxu0 %v2418
        %2496 = vmatprep.subr.bf16.mxu0 0
        %2497 = vmatpush1.bf16.msra.mxu0 %v2419
        %2498 = vmatprep.subr.bf16.mxu0 0
        %2499 = vmatpush1.bf16.msra.mxu0 %v2420
        %2500 = vmatprep.subr.bf16.mxu0 0
        %2501 = vmatpush1.bf16.msra.mxu0 %v2421
        %2502 = vmatprep.mubr.bf16.mxu0 %v2211
        %2503 = vmatmul.mubr.bf16.gmra.mrb[0].mxu0 %v2210
        %v2504 = vpop.f32.mrb[0].mxu0
        %v2505 = vadd.f32 0.0, %v2504
        %v2506 = vpop.f32.mrb[0].mxu0
        %v2507 = vpop.f32.mrb[0].mxu0
        %v2508 = vpop.f32.mrb[0].mxu0
        %2509 = vdwg.mxu0
        %2510 = vmatprep.subr.bf16.mxu0 0
        %2511 = vmatpush1.bf16.msra.mxu0 %v2422
        %2512 = vmatprep.subr.bf16.mxu0 0
        %2513 = vmatpush1.bf16.msra.mxu0 %v2423
        %2514 = vmatprep.subr.bf16.mxu0 0
        %2515 = vmatpush1.bf16.msra.mxu0 %v2424
        %2516 = vmatprep.subr.bf16.mxu0 0
        %2517 = vmatpush1.bf16.msra.mxu0 %v2425
        %2518 = vmatprep.subr.bf16.mxu0 0
        %2519 = vmatpush1.bf16.msra.mxu0 %v2426
        %2520 = vmatprep.subr.bf16.mxu0 0
        %2521 = vmatpush1.bf16.msra.mxu0 %v2427
        %2522 = vmatprep.subr.bf16.mxu0 0
        %2523 = vmatpush1.bf16.msra.mxu0 %v2428
        %2524 = vmatprep.subr.bf16.mxu0 0
        %2525 = vmatpush1.bf16.msra.mxu0 %v2429
        %2526 = vmatprep.subr.bf16.mxu0 0
        %2527 = vmatpush1.bf16.msra.mxu0 %v2430
        %2528 = vmatprep.subr.bf16.mxu0 0
        %2529 = vmatpush1.bf16.msra.mxu0 %v2431
        %2530 = vmatprep.subr.bf16.mxu0 0
        %2531 = vmatpush1.bf16.msra.mxu0 %v2432
        %2532 = vmatprep.subr.bf16.mxu0 0
        %2533 = vmatpush1.bf16.msra.mxu0 %v2433
        %2534 = vmatprep.subr.bf16.mxu0 0
        %2535 = vmatpush1.bf16.msra.mxu0 %v2434
        %2536 = vmatprep.subr.bf16.mxu0 0
        %2537 = vmatpush1.bf16.msra.mxu0 %v2435
        %2538 = vmatprep.subr.bf16.mxu0 0
        %2539 = vmatpush1.bf16.msra.mxu0 %v2436
        %2540 = vmatprep.subr.bf16.mxu0 0
        %2541 = vmatpush1.bf16.msra.mxu0 %v2437
        %2542 = vmatprep.mubr.bf16.mxu0 %v2213
        %2543 = vmatmul.mubr.bf16.gmra.mrb[0].mxu0 %v2212
        %v2544 = vpop.f32.mrb[0].mxu0
        %v2545 = vadd.f32 %v2505, %v2544
        %v2546 = vpop.f32.mrb[0].mxu0
        %v2547 = vpop.f32.mrb[0].mxu0
        %v2548 = vpop.f32.mrb[0].mxu0
        %2549 = vdwg.mxu0
        %v2550 = vadd.f32 %v1851, %v2545
        %v2551 = vld [vmem:[%s756] sm:$0x1]
        %v2553 = vlaneseq
        %v2554 = vshrl.u32 %v2553, 7
        %v2555 = vsub.s32 0, %v2554
        %v2556 = vrot.slane %v2551, %v2555
        %v2558 = vadd.f32 %v2550, %v2556
        %2559 = vst [vmem:[%s721] sm:$0xff] %v2558
        %p2560 = scmp.eq.s32.totalorder %s40, 1
        // Predicated region
        $region97: #{text_encoder_forward.1} parent=79 // pred_check
          %p2561 = pneg %p2560
        $region98: #{text_encoder_forward.1} parent=79 // pred_check_branch
          %2563 = sbr.rel (%p2561) target = $region100
        $region99: #{text_encoder_forward.1} parent=79 // pred_region
          %v2564 = vld [vmem:[%s13] sm:$0x1]
          %v2565 = vld [vmem:[%s14] sm:$0x1]
          %2566 = vadd.xlane.f32.xlu0 %v2558
          %v2567 = vpop.xlane.xlu0 %2566
          %v2568 = vmul.f32 %v2567, %v775
          %v2569 = vmul.f32 %v2558, %v2558
          %2570 = vadd.xlane.f32.xlu0 %v2569
          %v2571 = vpop.xlane.xlu0 %2570
          %v2572 = vmul.f32 %v2571, %v775
          %v2573 = vmul.f32 %v2568, %v2568
          %v2574 = vsub.f32 %v2572, %v2573
          %v2575 = vsub.f32 %v2558, %v2568
          %v2576 = vadd.f32 %v2574, 1e-05
          %v2577 = vrsqrt.pop %v2576
          %v2578 = vmul.f32 %v2575, %v2577
          %v2580 = vlaneseq
          %v2581 = vshrl.u32 %v2580, 7
          %v2582 = vsub.s32 0, %v2581
          %v2583 = vrot.slane %v2564, %v2582
          %v2585 = vmul.f32 %v2578, %v2583
          %v2587 = vlaneseq
          %v2588 = vshrl.u32 %v2587, 7
          %v2589 = vsub.s32 0, %v2588
          %v2590 = vrot.slane %v2565, %v2589
          %v2592 = vadd.f32 %v2585, %v2590
          %2593 = vst [vmem:[%s721] sm:$0xff] %v2592
        $region100: #{text_encoder_forward.1} parent=79 // pred_fallthru
          _
        %s2594 = sand.u32 %s435, 1
        %s2595 = scalar_lea.sflag [#allocation5], %s2594
        %s2596 = sand.u32 %s435, 1
        %s2597 = smul.addr %s2596, 8
        %s2598 = scalar_lea.vmem [#allocation9], %s2597
        // Predicated region
        $region101: #{text_encoder_forward.1} parent=79 // pred_check
          %p2599 = pneg %p445
        $region102: #{text_encoder_forward.1} parent=79 // pred_check_branch
          %2601 = sbr.rel (%p2599) target = $region104
        $region103: #{text_encoder_forward.1} parent=79 // pred_region
          %s2603 = ssub.s32 128, 128
          %2604 = vsyncadd %s2595, %s2603
          %s2605 = smul.addr %s39, 128
          %s2606 = scalar_lea.hbm %s15, %s2605
          %s2608 = sshll.u32 %s2598, 4
          %s2609 = int_to_ptr.vmem [resolvable:$true] %s2608
          %2611 = dma.vmem_to_hbm [thread:$0]  %s2609, 128, %s2606, %s2595
        $region104: #{text_encoder_forward.1} parent=79 // pred_fallthru
          _
      $region80: #{text_encoder_forward.1} parent=5 // pred_fallthru
        _
      %p2612 = scmp.le.s32.totalorder 2, %s30
      // Predicated region
      $region105: #{text_encoder_forward.1} parent=5 // pred_check
        %p2613 = pneg %p2612
      $region106: #{text_encoder_forward.1} parent=5 // pred_check_branch
        %2615 = sbr.rel (%p2613) target = $region108
      $region107: #{text_encoder_forward.1} parent=5 // pred_region
        %s2616 = ssub.s32 %s30, 2
        // Predicated region
        $region109: #{text_encoder_forward.1} parent=107 // pred_check
          %p2617 = pneg %p451
        $region110: #{text_encoder_forward.1} parent=107 // pred_check_branch
          %2619 = sbr.rel (%p2617) target = $region112
        $region111: #{text_encoder_forward.1} parent=107 // pred_region
          %s2620 = sand.u32 %s436, 1
          %s2621 = scalar_lea.sflag [#allocation5], %s2620
          %s2622 = sand.u32 %s436, 1
          %s2623 = smul.addr %s2622, 8
          %s2624 = scalar_lea.vmem [#allocation9], %s2623
          %2625 = dma.done %s2621, 128
        $region112: #{text_encoder_forward.1} parent=107 // pred_fallthru
          _
      $region108: #{text_encoder_forward.1} parent=5 // pred_fallthru
        _
    $region6: #{text_encoder_forward.1} parent=1 // loop_footer
      %s34 = sadd.s32 1, %s30
    $region7: #{text_encoder_forward.1} parent=1 // loop_footer_branch
      %29 = sbr.rel target = $region3
    $region8: #{text_encoder_forward.1} parent=1 // loop_exit
      _
    %2626 = vsyncpa [#allocation4], 1
    %s2627 = scalar_lea.sflag [#allocation4], 1
    %2628 = vsyncpa %s2627, 1
    %2629 = vsyncpa [#allocation7], 1
    %s2630 = scalar_lea.sflag [#allocation7], 1
    %2631 = vsyncpa %s2630, 1
    %2632 = vsyncpa [#allocation5], 1
    %s2633 = scalar_lea.sflag [#allocation5], 1
    %2634 = vsyncpa %s2633, 1

</llo_original>
